<compile_context>
chip_gen: v7x
topology: tpu7x:2x2x1
jax: 0.10.0
libtpu: 0.0.40
codegen_flags: <defaults>
</compile_context>

<pallas_src>
import math
import jax
import jax.numpy as jnp
from jax.experimental import pallas as pl
from jax.experimental.pallas import tpu as pltpu

# ----- model hyperparameters (small, consistent with the module __init__) -----
D_MODEL = 32
D_INNER = 64
N_HEAD = 2
D_K = 16
D_V = 16
KSIZE = 9          # FastSpeech pos-ffn conv1 kernel size
PAD = KSIZE // 2
LN_EPS = 1e-5      # nn.LayerNorm default
NEG_INF = -1e30    # finite stand-in for masked_fill(-inf)


def _layernorm(x, gamma, beta):
    mean = jnp.mean(x, axis=-1, keepdims=True)
    var = jnp.mean(jnp.square(x - mean), axis=-1, keepdims=True)
    return (x - mean) * jax.lax.rsqrt(var + LN_EPS) * gamma + beta


def fft_block_kernel(
    # scalar prefetch (SMEM)
    lengths_ref,
    # inputs
    x_ref,
    wqkv_ref, bqkv_ref, wo_ref, bo_ref, ln1_g_ref, ln1_b_ref,
    c1_w_ref, c1_b_ref, c2_w_ref, c2_b_ref, ln2_g_ref, ln2_b_ref,
    # outputs (attention probabilities are optional)
    *out_refs,
):
    out_ref = out_refs[0]
    attn_ref = out_refs[1] if len(out_refs) > 1 else None

    bb, T, _ = x_ref.shape                      # batch-block, seq len (static)
    rows = bb * T
    b0 = pl.program_id(0) * bb                  # first batch index in this block
    mxu_dt = wqkv_ref.dtype                     # bf16 (or f32) at the MXU

    # ---- per-batch valid lengths (SMEM scalars) -> in-kernel masks ----
    lens = [lengths_ref[b0 + i] for i in range(bb)]

    # key-padding attention bias, (bb, 1, T): broadcasts over the query axis.
    key_b = jax.lax.broadcasted_iota(jnp.int32, (bb, 1, T), 0)
    key_p = jax.lax.broadcasted_iota(jnp.int32, (bb, 1, T), 2)
    key_len = jnp.zeros((bb, 1, T), jnp.int32)
    for i in range(bb):
        key_len = jnp.where(key_b == i, lens[i], key_len)
    mask_bias = jnp.where(key_p >= key_len, NEG_INF, 0.0).astype(jnp.float32)

    # non-pad row mask, (rows, 1): broadcasts over the model lanes.
    row_b = jax.lax.broadcasted_iota(jnp.int32, (bb, T, 1), 0)
    row_p = jax.lax.broadcasted_iota(jnp.int32, (bb, T, 1), 1)
    row_len = jnp.zeros((bb, T, 1), jnp.int32)
    for i in range(bb):
        row_len = jnp.where(row_b == i, lens[i], row_len)
    npm = (row_p < row_len).astype(jnp.float32).reshape(rows, 1)
    pos = row_p.reshape(rows, 1)                # time index within each sequence

    # ---------------- Multi-head self attention ----------------
    x = x_ref[...].reshape(rows, D_MODEL)       # (BB*T, D) f32
    qkv = jnp.dot(x.astype(mxu_dt), wqkv_ref[...],
                  preferred_element_type=jnp.float32) + bqkv_ref[...]
    qkv_m = qkv.astype(mxu_dt).reshape(bb, T, 3 * N_HEAD * D_K)   # cast once

    inv_temp = 1.0 / math.sqrt(D_K)
    q_off, k_off, v_off = 0, N_HEAD * D_K, 2 * N_HEAD * D_K
    head_ctx = []
    for h in range(N_HEAD):
        qh = qkv_m[:, :, q_off + h * D_K: q_off + (h + 1) * D_K]
        kh = qkv_m[:, :, k_off + h * D_K: k_off + (h + 1) * D_K]
        vh = qkv_m[:, :, v_off + h * D_V: v_off + (h + 1) * D_V]
        scores = jnp.einsum("bqd,bkd->bqk", qh, kh,
                            preferred_element_type=jnp.float32) * inv_temp
        scores = scores + mask_bias             # masked_fill(mask, -inf)
        scores = scores - jnp.max(scores, axis=-1, keepdims=True)
        e = jnp.exp(scores)                     # f32 softmax statistics
        probs = e * pl.reciprocal(jnp.sum(e, axis=-1, keepdims=True), approx=True)
        if attn_ref is not None:
            attn_ref[h] = probs.astype(attn_ref.dtype)
        head_ctx.append(jnp.einsum("bqk,bkd->bqd", probs.astype(mxu_dt), vh,
                                   preferred_element_type=jnp.float32))
    # lane-concatenate heads in registers (no ctx scratch round trip)
    ctx = jnp.concatenate(head_ctx, axis=-1).reshape(rows, N_HEAD * D_V)

    attn_out = jnp.dot(ctx.astype(mxu_dt), wo_ref[...],
                       preferred_element_type=jnp.float32) + bo_ref[...]
    # TODO(synk): dropout(p=0.1) omitted — kernel implements eval/inference mode.
    attn_out = _layernorm(attn_out + x, ln1_g_ref[...], ln1_b_ref[...])
    attn_out = attn_out * npm                   # enc_output *= non_pad_mask

    # ---------------- Position-wise feed forward ----------------
    residual = attn_out
    # conv1d(k=9, pad=4) as one im2col matmul; the (rows, K*D) LHS is built in
    # registers from XLU rolls of the activation, zero-masked wherever the
    # source time index falls outside [0, T) (covers both the zero padding and
    # the cross-sequence rows introduced by flattening the batch block).
    taps = []
    for k in range(KSIZE):
        off = k - PAD
        if off == 0:
            taps.append(residual)
            continue
        shifted = pltpu.roll(residual, shift=(-off) % rows, axis=0)
        t_src = pos + off
        valid = jnp.logical_and(t_src >= 0, t_src < T).astype(jnp.float32)
        taps.append(shifted * valid)
    unf = jnp.concatenate(taps, axis=-1)        # (rows, KSIZE * D_MODEL)

    hidden = jnp.maximum(
        jnp.dot(unf.astype(mxu_dt), c1_w_ref[...],
                preferred_element_type=jnp.float32) + c1_b_ref[...], 0.0)
    ffn = jnp.dot(hidden.astype(mxu_dt), c2_w_ref[...],     # conv1d(k=1)
                  preferred_element_type=jnp.float32) + c2_b_ref[...]
    ffn = _layernorm(ffn + residual, ln2_g_ref[...], ln2_b_ref[...])
    ffn = ffn * npm                             # enc_output *= non_pad_mask
    out_ref[...] = ffn.reshape(bb, T, D_MODEL).astype(out_ref.dtype)


def _pick_batch_block(B, T, attn_itemsize, *, target_rows=512,
                      attn_budget_bytes=16 << 20):
    """Largest divisor of B whose block hits the MXU row target and keeps the
    double-buffered attention out-block inside a VMEM budget, then reduced (if
    possible) so the grid keeps >= 2 steps (v7x has 2 TensorCores)."""
    best = 1
    for d in range(1, B + 1):
        if B % d:
            continue
        if d > 1 and d * T > target_rows:
            continue
        if 2 * N_HEAD * d * T * T * attn_itemsize > attn_budget_bytes:
            continue
        best = d
    if B // best < 2 and B >= 2:
        for d in range(best - 1, 0, -1):
            if B % d == 0 and B // d >= 2:
                best = d
                break
    return best


def fft_block(enc_input, lengths, params, *, mxu_dtype=jnp.bfloat16,
              attn_dtype=jnp.float32, return_attn=True, batch_block=None):
    """enc_input: (B,T,D_MODEL) f32; lengths: (B,) int32 valid sequence lengths.

    Equivalent to the PyTorch FFTBlock with
      non_pad_mask[b,t,0]  = (t < lengths[b])
      slf_attn_mask[b,q,k] = (k >= lengths[b])   (key-padding mask)
    which is how FastSpeech builds both masks.  Masks are generated in-kernel.
    """
    B, T, D = enc_input.shape
    assert D == D_MODEL
    (wq, bq, wk, bk, wv, bv, wo, bo, ln1_g, ln1_b,
     c1_w, c1_b, c2_w, c2_b, ln2_g, ln2_b) = params

    # ---- wrapper-side repacking (one-time, outside the kernel) ----
    wqkv = jnp.concatenate([wq, wk, wv], axis=1).astype(mxu_dtype)     # (32, 96)
    bqkv = jnp.concatenate([bq, bk, bv], axis=1).astype(jnp.float32)   # (1, 96)
    c1_w2d = c1_w.reshape(KSIZE * D_MODEL, D_INNER).astype(mxu_dtype)  # (288, 64)
    kernel_params = [
        wqkv, bqkv,
        wo.astype(mxu_dtype), bo, ln1_g, ln1_b,
        c1_w2d, c1_b, c2_w.astype(mxu_dtype), c2_b, ln2_g, ln2_b,
    ]

    attn_itemsize = jnp.dtype(attn_dtype).itemsize if return_attn else 0
    BB = batch_block or _pick_batch_block(B, T, attn_itemsize)
    assert B % BB == 0, "batch_block must divide the batch size"
    n_steps = B // BB
    rows = BB * T
    # TODO(synk): for very large T (~1-2k+) on v7x, add a query-block grid axis
    # with online softmax instead of whole-(T,T) scores per batch block.

    def full_spec(shape):
        return pl.BlockSpec(shape, lambda g, lens, _n=len(shape): (0,) * _n)

    in_specs = [pl.BlockSpec((BB, T, D_MODEL), lambda g, lens: (g, 0, 0))] + \
               [full_spec(p.shape) for p in kernel_params]
    out_specs = [pl.BlockSpec((BB, T, D_MODEL), lambda g, lens: (g, 0, 0))]
    out_shapes = [jax.ShapeDtypeStruct((B, T, D_MODEL), jnp.float32)]
    if return_attn:
        out_specs.append(
            pl.BlockSpec((N_HEAD, BB, T, T), lambda g, lens: (0, g, 0, 0)))
        out_shapes.append(jax.ShapeDtypeStruct((N_HEAD, B, T, T), attn_dtype))

    # ---- cost estimate for the XLA scheduler ----
    flops_per_tok = 2 * (D_MODEL * 3 * N_HEAD * D_K          # fused QKV
                         + 2 * T * N_HEAD * D_K               # QK^T + P.V
                         + N_HEAD * D_V * D_MODEL             # output proj
                         + KSIZE * D_MODEL * D_INNER          # conv1 (im2col)
                         + D_INNER * D_MODEL)                 # conv2
    param_bytes = sum(int(p.size) * p.dtype.itemsize for p in kernel_params)
    bytes_accessed = (int(enc_input.size) * 4                 # x in
                      + B * T * D_MODEL * 4                   # enc_output
                      + N_HEAD * B * T * T * attn_itemsize    # attention probs
                      + param_bytes)
    cost = pl.CostEstimate(flops=int(B * T * flops_per_tok),
                           transcendentals=int(B * N_HEAD * T * T),
                           bytes_accessed=int(bytes_accessed))

    # ---- chip-aware VMEM budget: double-buffered I/O blocks + single-copy
    #      parameter blocks + a temporary estimate, kept below the physical
    #      capacity with headroom (64 MiB on v7x, 128 MiB on v5e/v6e). ----
    try:
        vmem_cap = int(pltpu.get_tpu_info().vmem_capacity_bytes)
    except Exception:        # no chip / older runtime: assume the smaller v7x VMEM
        vmem_cap = 64 * 1024 * 1024
    io_block_bytes = 2 * 2 * rows * D_MODEL * 4               # x + out, double-buffered
    attn_block_bytes = 2 * N_HEAD * rows * T * attn_itemsize  # attn out, double-buffered
    temp_bytes = (rows * 3 * N_HEAD * D_K * 6                 # qkv f32 + bf16 copy
                  + 4 * BB * T * T * 4                        # scores/exp/probs live set
                  + rows * KSIZE * D_MODEL * 6                # im2col f32 + bf16
                  + rows * D_INNER * 6                        # hidden f32 + bf16
                  + 8 * rows * D_MODEL * 4)                   # misc f32 temporaries
    want = io_block_bytes + attn_block_bytes + param_bytes + temp_bytes + (4 << 20)
    headroom_cap = vmem_cap - (12 << 20)
    vmem_limit = int(max(min(want, headroom_cap), min(16 << 20, headroom_cap)))

    results = pl.pallas_call(
        fft_block_kernel,
        out_shape=tuple(out_shapes),
        grid_spec=pltpu.PrefetchScalarGridSpec(
            num_scalar_prefetch=1,
            grid=(n_steps,),
            in_specs=in_specs,
            out_specs=tuple(out_specs),
        ),
        compiler_params=pltpu.CompilerParams(
            dimension_semantics=("parallel",),
            vmem_limit_bytes=vmem_limit),
        cost_estimate=cost,
    )(lengths.astype(jnp.int32), enc_input.astype(jnp.float32), *kernel_params)

    if return_attn:
        enc_output, attn = results
        # PyTorch returns attn with shape (n_head * B, T, T), index = head*B + batch.
        # TODO(synk): padded query rows see finite -1e30 masking (well-defined
        # probabilities over valid keys) where PyTorch masked_fill(-inf) can yield
        # NaN rows when a whole row is masked; enc_output is identical after the
        # non_pad_mask multiply.
        return enc_output, attn.reshape(N_HEAD * B, T, T)
    (enc_output,) = results
    return enc_output, None


def make_params(key):
    ks = jax.random.split(key, 12)
    s = 0.05
    f32 = jnp.float32
    wq = (jax.random.normal(ks[0], (D_MODEL, N_HEAD * D_K)) * s).astype(f32)
    bq = (jax.random.normal(ks[1], (1, N_HEAD * D_K)) * s).astype(f32)
    wk = (jax.random.normal(ks[2], (D_MODEL, N_HEAD * D_K)) * s).astype(f32)
    bk = (jax.random.normal(ks[3], (1, N_HEAD * D_K)) * s).astype(f32)
    wv = (jax.random.normal(ks[4], (D_MODEL, N_HEAD * D_V)) * s).astype(f32)
    bv = (jax.random.normal(ks[5], (1, N_HEAD * D_V)) * s).astype(f32)
    wo = (jax.random.normal(ks[6], (N_HEAD * D_V, D_MODEL)) * s).astype(f32)
    bo = (jax.random.normal(ks[7], (1, D_MODEL)) * s).astype(f32)
    ln1_g = jnp.ones((1, D_MODEL), f32)
    ln1_b = jnp.zeros((1, D_MODEL), f32)
    # conv1 weight stored as (K, d_in, d_hid) == torch (d_hid, d_in, K) transposed
    c1_w = (jax.random.normal(ks[8], (KSIZE, D_MODEL, D_INNER)) * s).astype(f32)
    c1_b = (jax.random.normal(ks[9], (1, D_INNER)) * s).astype(f32)
    # conv2 (kernel_size=1) weight stored as (d_hid, d_in)
    c2_w = (jax.random.normal(ks[10], (D_INNER, D_MODEL)) * s).astype(f32)
    c2_b = (jax.random.normal(ks[11], (1, D_MODEL)) * s).astype(f32)
    ln2_g = jnp.ones((1, D_MODEL), f32)
    ln2_b = jnp.zeros((1, D_MODEL), f32)
    return (wq, bq, wk, bk, wv, bv, wo, bo, ln1_g, ln1_b,
            c1_w, c1_b, c2_w, c2_b, ln2_g, ln2_b)


if __name__ == "__main__":
    B, T = 2, 8
    key = jax.random.PRNGKey(0)
    k_x, k_p = jax.random.split(key)
    x = jax.random.normal(k_x, (B, T, D_MODEL), dtype=jnp.float32)

    # valid sequence lengths; masks are derived in-kernel:
    #   non_pad_mask[b,t]    = t < lengths[b]
    #   slf_attn_mask[b,:,k] = k >= lengths[b]
    lengths = jnp.array([T, T - 2], dtype=jnp.int32)

    params = make_params(k_p)
    enc_output, enc_slf_attn = fft_block(x, lengths, params)
    jax.block_until_ready((enc_output, enc_slf_attn))
    assert enc_output.shape == (B, T, D_MODEL)
    assert enc_slf_attn.shape == (N_HEAD * B, T, T)
    print("KERNEL_OK")
</pallas_src>

<mosaic_0001>
module attributes {stable_mosaic.version = 11 : i64} {
  func.func @fft_block_kernel(%arg0: i32, %arg1: memref<2xi32, #tpu.memory_space<smem>>, %arg2: memref<1x8x32xf32, #tpu.memory_space<vmem>>, %arg3: memref<32x96xbf16, #tpu.memory_space<vmem>>, %arg4: memref<1x96xf32, #tpu.memory_space<vmem>>, %arg5: memref<32x32xbf16, #tpu.memory_space<vmem>>, %arg6: memref<1x32xf32, #tpu.memory_space<vmem>>, %arg7: memref<1x32xf32, #tpu.memory_space<vmem>>, %arg8: memref<1x32xf32, #tpu.memory_space<vmem>>, %arg9: memref<288x64xbf16, #tpu.memory_space<vmem>>, %arg10: memref<1x64xf32, #tpu.memory_space<vmem>>, %arg11: memref<64x32xbf16, #tpu.memory_space<vmem>>, %arg12: memref<1x32xf32, #tpu.memory_space<vmem>>, %arg13: memref<1x32xf32, #tpu.memory_space<vmem>>, %arg14: memref<1x32xf32, #tpu.memory_space<vmem>>, %arg15: memref<1x8x32xf32, #tpu.memory_space<vmem>>, %arg16: memref<2x1x8x8xf32, #tpu.memory_space<vmem>>) attributes {dimension_semantics = [#tpu.dimension_semantics<parallel>], iteration_bounds = array<i64: 2>, scalar_prefetch = 1 : i64, scratch_operands = 0 : i64, tpu.core_type = #tpu.core_type<tc>, window_params = [{transform_indices = @transform_0, window_bounds = array<i64: 1, 8, 32>}, {pipeline_mode = #tpu.pipeline_mode<synchronous>, transform_indices = @transform_1, window_bounds = array<i64: 32, 96>}, {pipeline_mode = #tpu.pipeline_mode<synchronous>, transform_indices = @transform_2, window_bounds = array<i64: 1, 96>}, {pipeline_mode = #tpu.pipeline_mode<synchronous>, transform_indices = @transform_3, window_bounds = array<i64: 32, 32>}, {pipeline_mode = #tpu.pipeline_mode<synchronous>, transform_indices = @transform_4, window_bounds = array<i64: 1, 32>}, {pipeline_mode = #tpu.pipeline_mode<synchronous>, transform_indices = @transform_5, window_bounds = array<i64: 1, 32>}, {pipeline_mode = #tpu.pipeline_mode<synchronous>, transform_indices = @transform_6, window_bounds = array<i64: 1, 32>}, {pipeline_mode = #tpu.pipeline_mode<synchronous>, transform_indices = @transform_7, window_bounds = array<i64: 288, 64>}, {pipeline_mode = #tpu.pipeline_mode<synchronous>, transform_indices = @transform_8, window_bounds = array<i64: 1, 64>}, {pipeline_mode = #tpu.pipeline_mode<synchronous>, transform_indices = @transform_9, window_bounds = array<i64: 64, 32>}, {pipeline_mode = #tpu.pipeline_mode<synchronous>, transform_indices = @transform_10, window_bounds = array<i64: 1, 32>}, {pipeline_mode = #tpu.pipeline_mode<synchronous>, transform_indices = @transform_11, window_bounds = array<i64: 1, 32>}, {pipeline_mode = #tpu.pipeline_mode<synchronous>, transform_indices = @transform_12, window_bounds = array<i64: 1, 32>}, {transform_indices = @transform_13, window_bounds = array<i64: 1, 8, 32>}, {transform_indices = @transform_14, window_bounds = array<i64: 2, 1, 8, 8>}]} {
    %c1_i32 = arith.constant 1 : i32
    %0 = arith.muli %arg0, %c1_i32 : i32
    %c0_i32 = arith.constant 0 : i32
    %1 = arith.addi %0, %c0_i32 : i32
    %2 = arith.index_cast %1 : i32 to index
    %3 = memref.load %arg1[%2] : memref<2xi32, #tpu.memory_space<smem>>
    %4 = tpu.iota {dimensions = array<i32: 0>} : vector<1x1x8xi32>
    %5 = tpu.iota {dimensions = array<i32: 2>} : vector<1x1x8xi32>
    %c0_i32_0 = arith.constant 0 : i32
    %6 = vector.broadcast %c0_i32_0 : i32 to vector<1x1x8xi32>
    %c0_i32_1 = arith.constant 0 : i32
    %7 = vector.broadcast %c0_i32_1 : i32 to vector<1x1x8xi32>
    %8 = arith.cmpi eq, %4, %7 : vector<1x1x8xi32>
    %9 = vector.broadcast %3 : i32 to vector<1x1x8xi32>
    %10 = arith.select %8, %9, %6 : vector<1x1x8xi1>, vector<1x1x8xi32>
    %11 = arith.cmpi sge, %5, %10 : vector<1x1x8xi32>
    %cst = arith.constant -1.000000e+30 : f32
    %cst_2 = arith.constant 0.000000e+00 : f32
    %12 = vector.broadcast %cst : f32 to vector<1x1x8xf32>
    %13 = vector.broadcast %cst_2 : f32 to vector<1x1x8xf32>
    %14 = arith.select %11, %12, %13 : vector<1x1x8xi1>, vector<1x1x8xf32>
    %15 = tpu.iota {dimensions = array<i32: 0>} : vector<1x8x1xi32>
    %16 = tpu.iota {dimensions = array<i32: 1>} : vector<1x8x1xi32>
    %c0_i32_3 = arith.constant 0 : i32
    %17 = vector.broadcast %c0_i32_3 : i32 to vector<1x8x1xi32>
    %c0_i32_4 = arith.constant 0 : i32
    %18 = vector.broadcast %c0_i32_4 : i32 to vector<1x8x1xi32>
    %19 = arith.cmpi eq, %15, %18 : vector<1x8x1xi32>
    %20 = vector.broadcast %3 : i32 to vector<1x8x1xi32>
    %21 = arith.select %19, %20, %17 : vector<1x8x1xi1>, vector<1x8x1xi32>
    %22 = arith.cmpi slt, %16, %21 : vector<1x8x1xi32>
    %23 = arith.extui %22 : vector<1x8x1xi1> to vector<1x8x1xi32>
    %24 = arith.sitofp %23 : vector<1x8x1xi32> to vector<1x8x1xf32>
    %25 = vector.shape_cast %24 : vector<1x8x1xf32> to vector<8x1xf32>
    %26 = vector.shape_cast %16 : vector<1x8x1xi32> to vector<8x1xi32>
    %c0 = arith.constant 0 : index
    %c0_5 = arith.constant 0 : index
    %c0_6 = arith.constant 0 : index
    %27 = vector.load %arg2[%c0, %c0_5, %c0_6] : memref<1x8x32xf32, #tpu.memory_space<vmem>>, vector<1x8x32xf32>
    %28 = vector.shape_cast %27 : vector<1x8x32xf32> to vector<8x32xf32>
    %29 = arith.truncf %28 : vector<8x32xf32> to vector<8x32xbf16>
    %c0_7 = arith.constant 0 : index
    %c0_8 = arith.constant 0 : index
    %30 = vector.load %arg3[%c0_7, %c0_8] : memref<32x96xbf16, #tpu.memory_space<vmem>>, vector<32x96xbf16>
    %cst_9 = arith.constant dense<0.000000e+00> : vector<8x96xf32>
    %31 = tpu.matmul %29, %30, %cst_9 {dimension_numbers = #tpu.dot_dimension_numbers<[1], [0], [0], [1], [0, 0, 1, 1], [], []>} : vector<8x32xbf16>, vector<32x96xbf16>, vector<8x96xf32> -> vector<8x96xf32>
    %c0_10 = arith.constant 0 : index
    %c0_11 = arith.constant 0 : index
    %32 = vector.load %arg4[%c0_10, %c0_11] : memref<1x96xf32, #tpu.memory_space<vmem>>, vector<1x96xf32>
    %33 = vector.broadcast %32 : vector<1x96xf32> to vector<8x96xf32>
    %34 = arith.addf %31, %33 : vector<8x96xf32>
    %35 = arith.truncf %34 : vector<8x96xf32> to vector<8x96xbf16>
    %36 = vector.shape_cast %35 : vector<8x96xbf16> to vector<1x8x96xbf16>
    %37 = vector.extract_strided_slice %36 {offsets = [0, 0, 0], sizes = [1, 8, 16], strides = [1, 1, 1]} : vector<1x8x96xbf16> to vector<1x8x16xbf16>
    %38 = vector.extract_strided_slice %36 {offsets = [0, 0, 32], sizes = [1, 8, 16], strides = [1, 1, 1]} : vector<1x8x96xbf16> to vector<1x8x16xbf16>
    %39 = vector.extract_strided_slice %36 {offsets = [0, 0, 64], sizes = [1, 8, 16], strides = [1, 1, 1]} : vector<1x8x96xbf16> to vector<1x8x16xbf16>
    "tpu.trace_start"() <{level = 10 : i32, message = "bqd,bkd->bqk"}> : () -> ()
    %cst_12 = arith.constant dense<0.000000e+00> : vector<1x8x8xf32>
    %40 = tpu.matmul %37, %38, %cst_12 {dimension_numbers = #tpu.dot_dimension_numbers<[2], [2], [1], [1], [0, 0, 0, 1, 1, 1], [0], [0]>} : vector<1x8x16xbf16>, vector<1x8x16xbf16>, vector<1x8x8xf32> -> vector<1x8x8xf32>
    "tpu.trace_stop"() : () -> ()
    %cst_13 = arith.constant 2.500000e-01 : f32
    %41 = vector.broadcast %cst_13 : f32 to vector<1x8x8xf32>
    %42 = arith.mulf %40, %41 : vector<1x8x8xf32>
    %43 = vector.broadcast %14 : vector<1x1x8xf32> to vector<1x8x8xf32>
    %44 = arith.addf %42, %43 : vector<1x8x8xf32>
    %cst_14 = arith.constant dense<0xFF800000> : vector<1x8xf32>
    %45 = vector.multi_reduction <maximumf>, %44, %cst_14 [2] : vector<1x8x8xf32> to vector<1x8xf32>
    %46 = vector.shape_cast %45 : vector<1x8xf32> to vector<1x8x1xf32>
    %47 = vector.broadcast %46 : vector<1x8x1xf32> to vector<1x8x8xf32>
    %48 = arith.subf %44, %47 : vector<1x8x8xf32>
    %49 = math.exp %48 : vector<1x8x8xf32>
    %cst_15 = arith.constant dense<0.000000e+00> : vector<1x8xf32>
    %50 = vector.multi_reduction <add>, %49, %cst_15 [2] : vector<1x8x8xf32> to vector<1x8xf32>
    %51 = vector.shape_cast %50 : vector<1x8xf32> to vector<1x8x1xf32>
    %52 = tpu.reciprocal %51 {approx = true} : vector<1x8x1xf32> -> vector<1x8x1xf32>
    %53 = vector.broadcast %52 : vector<1x8x1xf32> to vector<1x8x8xf32>
    %54 = arith.mulf %49, %53 : vector<1x8x8xf32>
    %c0_16 = arith.constant 0 : index
    %c0_17 = arith.constant 0 : index
    %c0_18 = arith.constant 0 : index
    %c0_19 = arith.constant 0 : index
    %55 = vector.load %arg16[%c0_16, %c0_17, %c0_18, %c0_19] : memref<2x1x8x8xf32, #tpu.memory_space<vmem>>, vector<1x1x8x8xf32>
    %56 = vector.shape_cast %55 : vector<1x1x8x8xf32> to vector<1x8x8xf32>
    %57 = vector.shape_cast %54 : vector<1x8x8xf32> to vector<1x1x8x8xf32>
    tpu.vector_store %arg16[%c0_16, %c0_17, %c0_18, %c0_19], %57 {strides = array<i32>} : memref<2x1x8x8xf32, #tpu.memory_space<vmem>>, vector<1x1x8x8xf32>,
    %58 = arith.truncf %54 : vector<1x8x8xf32> to vector<1x8x8xbf16>
    "tpu.trace_start"() <{level = 10 : i32, message = "bqk,bkd->bqd"}> : () -> ()
    %cst_20 = arith.constant dense<0.000000e+00> : vector<1x8x16xf32>
    %59 = tpu.matmul %58, %39, %cst_20 {dimension_numbers = #tpu.dot_dimension_numbers<[2], [1], [1], [2], [0, 0, 0, 1, 1, 2], [0], [0]>} : vector<1x8x8xbf16>, vector<1x8x16xbf16>, vector<1x8x16xf32> -> vector<1x8x16xf32>
    "tpu.trace_stop"() : () -> ()
    %60 = vector.extract_strided_slice %36 {offsets = [0, 0, 16], sizes = [1, 8, 16], strides = [1, 1, 1]} : vector<1x8x96xbf16> to vector<1x8x16xbf16>
    %61 = vector.extract_strided_slice %36 {offsets = [0, 0, 48], sizes = [1, 8, 16], strides = [1, 1, 1]} : vector<1x8x96xbf16> to vector<1x8x16xbf16>
    %62 = vector.extract_strided_slice %36 {offsets = [0, 0, 80], sizes = [1, 8, 16], strides = [1, 1, 1]} : vector<1x8x96xbf16> to vector<1x8x16xbf16>
    "tpu.trace_start"() <{level = 10 : i32, message = "bqd,bkd->bqk"}> : () -> ()
    %cst_21 = arith.constant dense<0.000000e+00> : vector<1x8x8xf32>
    %63 = tpu.matmul %60, %61, %cst_21 {dimension_numbers = #tpu.dot_dimension_numbers<[2], [2], [1], [1], [0, 0, 0, 1, 1, 1], [0], [0]>} : vector<1x8x16xbf16>, vector<1x8x16xbf16>, vector<1x8x8xf32> -> vector<1x8x8xf32>
    "tpu.trace_stop"() : () -> ()
    %cst_22 = arith.constant 2.500000e-01 : f32
    %64 = vector.broadcast %cst_22 : f32 to vector<1x8x8xf32>
    %65 = arith.mulf %63, %64 : vector<1x8x8xf32>
    %66 = vector.broadcast %14 : vector<1x1x8xf32> to vector<1x8x8xf32>
    %67 = arith.addf %65, %66 : vector<1x8x8xf32>
    %cst_23 = arith.constant dense<0xFF800000> : vector<1x8xf32>
    %68 = vector.multi_reduction <maximumf>, %67, %cst_23 [2] : vector<1x8x8xf32> to vector<1x8xf32>
    %69 = vector.shape_cast %68 : vector<1x8xf32> to vector<1x8x1xf32>
    %70 = vector.broadcast %69 : vector<1x8x1xf32> to vector<1x8x8xf32>
    %71 = arith.subf %67, %70 : vector<1x8x8xf32>
    %72 = math.exp %71 : vector<1x8x8xf32>
    %cst_24 = arith.constant dense<0.000000e+00> : vector<1x8xf32>
    %73 = vector.multi_reduction <add>, %72, %cst_24 [2] : vector<1x8x8xf32> to vector<1x8xf32>
    %74 = vector.shape_cast %73 : vector<1x8xf32> to vector<1x8x1xf32>
    %75 = tpu.reciprocal %74 {approx = true} : vector<1x8x1xf32> -> vector<1x8x1xf32>
    %76 = vector.broadcast %75 : vector<1x8x1xf32> to vector<1x8x8xf32>
    %77 = arith.mulf %72, %76 : vector<1x8x8xf32>
    %c1 = arith.constant 1 : index
    %c0_25 = arith.constant 0 : index
    %c0_26 = arith.constant 0 : index
    %c0_27 = arith.constant 0 : index
    %78 = vector.load %arg16[%c1, %c0_25, %c0_26, %c0_27] : memref<2x1x8x8xf32, #tpu.memory_space<vmem>>, vector<1x1x8x8xf32>
    %79 = vector.shape_cast %78 : vector<1x1x8x8xf32> to vector<1x8x8xf32>
    %80 = vector.shape_cast %77 : vector<1x8x8xf32> to vector<1x1x8x8xf32>
    tpu.vector_store %arg16[%c1, %c0_25, %c0_26, %c0_27], %80 {strides = array<i32>} : memref<2x1x8x8xf32, #tpu.memory_space<vmem>>, vector<1x1x8x8xf32>,
    %81 = arith.truncf %77 : vector<1x8x8xf32> to vector<1x8x8xbf16>
    "tpu.trace_start"() <{level = 10 : i32, message = "bqk,bkd->bqd"}> : () -> ()
    %cst_28 = arith.constant dense<0.000000e+00> : vector<1x8x16xf32>
    %82 = tpu.matmul %81, %62, %cst_28 {dimension_numbers = #tpu.dot_dimension_numbers<[2], [1], [1], [2], [0, 0, 0, 1, 1, 2], [0], [0]>} : vector<1x8x8xbf16>, vector<1x8x16xbf16>, vector<1x8x16xf32> -> vector<1x8x16xf32>
    "tpu.trace_stop"() : () -> ()
    %83 = tpu.concatenate %59, %82 in 2 : vector<1x8x16xf32>, vector<1x8x16xf32> -> vector<1x8x32xf32>
    %84 = vector.shape_cast %83 : vector<1x8x32xf32> to vector<8x32xf32>
    %85 = arith.truncf %84 : vector<8x32xf32> to vector<8x32xbf16>
    %c0_29 = arith.constant 0 : index
    %c0_30 = arith.constant 0 : index
    %86 = vector.load %arg5[%c0_29, %c0_30] : memref<32x32xbf16, #tpu.memory_space<vmem>>, vector<32x32xbf16>
    %cst_31 = arith.constant dense<0.000000e+00> : vector<8x32xf32>
    %87 = tpu.matmul %85, %86, %cst_31 {dimension_numbers = #tpu.dot_dimension_numbers<[1], [0], [0], [1], [0, 0, 1, 1], [], []>} : vector<8x32xbf16>, vector<32x32xbf16>, vector<8x32xf32> -> vector<8x32xf32>
    %c0_32 = arith.constant 0 : index
    %c0_33 = arith.constant 0 : index
    %88 = vector.load %arg6[%c0_32, %c0_33] : memref<1x32xf32, #tpu.memory_space<vmem>>, vector<1x32xf32>
    %89 = vector.broadcast %88 : vector<1x32xf32> to vector<8x32xf32>
    %90 = arith.addf %87, %89 : vector<8x32xf32>
    %91 = arith.addf %90, %28 : vector<8x32xf32>
    %c0_34 = arith.constant 0 : index
    %c0_35 = arith.constant 0 : index
    %92 = vector.load %arg7[%c0_34, %c0_35] : memref<1x32xf32, #tpu.memory_space<vmem>>, vector<1x32xf32>
    %c0_36 = arith.constant 0 : index
    %c0_37 = arith.constant 0 : index
    %93 = vector.load %arg8[%c0_36, %c0_37] : memref<1x32xf32, #tpu.memory_space<vmem>>, vector<1x32xf32>
    %cst_38 = arith.constant dense<0.000000e+00> : vector<8xf32>
    %94 = vector.multi_reduction <add>, %91, %cst_38 [1] : vector<8x32xf32> to vector<8xf32>
    %95 = vector.shape_cast %94 : vector<8xf32> to vector<8x1xf32>
    %cst_39 = arith.constant 3.200000e+01 : f32
    %96 = vector.broadcast %cst_39 : f32 to vector<8x1xf32>
    %97 = arith.divf %95, %96 : vector<8x1xf32>
    %98 = vector.broadcast %97 : vector<8x1xf32> to vector<8x32xf32>
    %99 = arith.subf %91, %98 : vector<8x32xf32>
    %100 = arith.mulf %99, %99 : vector<8x32xf32>
    %cst_40 = arith.constant dense<0.000000e+00> : vector<8xf32>
    %101 = vector.multi_reduction <add>, %100, %cst_40 [1] : vector<8x32xf32> to vector<8xf32>
    %102 = vector.shape_cast %101 : vector<8xf32> to vector<8x1xf32>
    %cst_41 = arith.constant 3.200000e+01 : f32
    %103 = vector.broadcast %cst_41 : f32 to vector<8x1xf32>
    %104 = arith.divf %102, %103 : vector<8x1xf32>
    %105 = vector.broadcast %97 : vector<8x1xf32> to vector<8x32xf32>
    %106 = arith.subf %91, %105 : vector<8x32xf32>
    %cst_42 = arith.constant 9.99999974E-6 : f32
    %107 = vector.broadcast %cst_42 : f32 to vector<8x1xf32>
    %108 = arith.addf %104, %107 : vector<8x1xf32>
    %109 = math.rsqrt %108 : vector<8x1xf32>
    %110 = vector.broadcast %109 : vector<8x1xf32> to vector<8x32xf32>
    %111 = arith.mulf %106, %110 : vector<8x32xf32>
    %112 = vector.broadcast %92 : vector<1x32xf32> to vector<8x32xf32>
    %113 = arith.mulf %111, %112 : vector<8x32xf32>
    %114 = vector.broadcast %93 : vector<1x32xf32> to vector<8x32xf32>
    %115 = arith.addf %113, %114 : vector<8x32xf32>
    %116 = vector.broadcast %25 : vector<8x1xf32> to vector<8x32xf32>
    %117 = arith.mulf %115, %116 : vector<8x32xf32>
    %c4_i32 = arith.constant 4 : i32
    %118 = tpu.dynamic_rotate %117 by %c4_i32 dim 0 : vector<8x32xf32>, i32 -> vector<8x32xf32>
    %c-4_i32 = arith.constant -4 : i32
    %119 = vector.broadcast %c-4_i32 : i32 to vector<8x1xi32>
    %120 = arith.addi %26, %119 : vector<8x1xi32>
    %c0_i32_43 = arith.constant 0 : i32
    %121 = vector.broadcast %c0_i32_43 : i32 to vector<8x1xi32>
    %122 = arith.cmpi sge, %120, %121 : vector<8x1xi32>
    %c8_i32 = arith.constant 8 : i32
    %123 = vector.broadcast %c8_i32 : i32 to vector<8x1xi32>
    %124 = arith.cmpi slt, %120, %123 : vector<8x1xi32>
    %125 = arith.andi %122, %124 : vector<8x1xi1>
    %126 = arith.extui %125 : vector<8x1xi1> to vector<8x1xi32>
    %127 = arith.sitofp %126 : vector<8x1xi32> to vector<8x1xf32>
    %128 = vector.broadcast %127 : vector<8x1xf32> to vector<8x32xf32>
    %129 = arith.mulf %118, %128 : vector<8x32xf32>
    %c3_i32 = arith.constant 3 : i32
    %130 = tpu.dynamic_rotate %117 by %c3_i32 dim 0 : vector<8x32xf32>, i32 -> vector<8x32xf32>
    %c-3_i32 = arith.constant -3 : i32
    %131 = vector.broadcast %c-3_i32 : i32 to vector<8x1xi32>
    %132 = arith.addi %26, %131 : vector<8x1xi32>
    %c0_i32_44 = arith.constant 0 : i32
    %133 = vector.broadcast %c0_i32_44 : i32 to vector<8x1xi32>
    %134 = arith.cmpi sge, %132, %133 : vector<8x1xi32>
    %c8_i32_45 = arith.constant 8 : i32
    %135 = vector.broadcast %c8_i32_45 : i32 to vector<8x1xi32>
    %136 = arith.cmpi slt, %132, %135 : vector<8x1xi32>
    %137 = arith.andi %134, %136 : vector<8x1xi1>
    %138 = arith.extui %137 : vector<8x1xi1> to vector<8x1xi32>
    %139 = arith.sitofp %138 : vector<8x1xi32> to vector<8x1xf32>
    %140 = vector.broadcast %139 : vector<8x1xf32> to vector<8x32xf32>
    %141 = arith.mulf %130, %140 : vector<8x32xf32>
    %c2_i32 = arith.constant 2 : i32
    %142 = tpu.dynamic_rotate %117 by %c2_i32 dim 0 : vector<8x32xf32>, i32 -> vector<8x32xf32>
    %c-2_i32 = arith.constant -2 : i32
    %143 = vector.broadcast %c-2_i32 : i32 to vector<8x1xi32>
    %144 = arith.addi %26, %143 : vector<8x1xi32>
    %c0_i32_46 = arith.constant 0 : i32
    %145 = vector.broadcast %c0_i32_46 : i32 to vector<8x1xi32>
    %146 = arith.cmpi sge, %144, %145 : vector<8x1xi32>
    %c8_i32_47 = arith.constant 8 : i32
    %147 = vector.broadcast %c8_i32_47 : i32 to vector<8x1xi32>
    %148 = arith.cmpi slt, %144, %147 : vector<8x1xi32>
    %149 = arith.andi %146, %148 : vector<8x1xi1>
    %150 = arith.extui %149 : vector<8x1xi1> to vector<8x1xi32>
    %151 = arith.sitofp %150 : vector<8x1xi32> to vector<8x1xf32>
    %152 = vector.broadcast %151 : vector<8x1xf32> to vector<8x32xf32>
    %153 = arith.mulf %142, %152 : vector<8x32xf32>
    %c1_i32_48 = arith.constant 1 : i32
    %154 = tpu.dynamic_rotate %117 by %c1_i32_48 dim 0 : vector<8x32xf32>, i32 -> vector<8x32xf32>
    %c-1_i32 = arith.constant -1 : i32
    %155 = vector.broadcast %c-1_i32 : i32 to vector<8x1xi32>
    %156 = arith.addi %26, %155 : vector<8x1xi32>
    %c0_i32_49 = arith.constant 0 : i32
    %157 = vector.broadcast %c0_i32_49 : i32 to vector<8x1xi32>
    %158 = arith.cmpi sge, %156, %157 : vector<8x1xi32>
    %c8_i32_50 = arith.constant 8 : i32
    %159 = vector.broadcast %c8_i32_50 : i32 to vector<8x1xi32>
    %160 = arith.cmpi slt, %156, %159 : vector<8x1xi32>
    %161 = arith.andi %158, %160 : vector<8x1xi1>
    %162 = arith.extui %161 : vector<8x1xi1> to vector<8x1xi32>
    %163 = arith.sitofp %162 : vector<8x1xi32> to vector<8x1xf32>
    %164 = vector.broadcast %163 : vector<8x1xf32> to vector<8x32xf32>
    %165 = arith.mulf %154, %164 : vector<8x32xf32>
    %c7_i32 = arith.constant 7 : i32
    %166 = tpu.dynamic_rotate %117 by %c7_i32 dim 0 : vector<8x32xf32>, i32 -> vector<8x32xf32>
    %c1_i32_51 = arith.constant 1 : i32
    %167 = vector.broadcast %c1_i32_51 : i32 to vector<8x1xi32>
    %168 = arith.addi %26, %167 : vector<8x1xi32>
    %c0_i32_52 = arith.constant 0 : i32
    %169 = vector.broadcast %c0_i32_52 : i32 to vector<8x1xi32>
    %170 = arith.cmpi sge, %168, %169 : vector<8x1xi32>
    %c8_i32_53 = arith.constant 8 : i32
    %171 = vector.broadcast %c8_i32_53 : i32 to vector<8x1xi32>
    %172 = arith.cmpi slt, %168, %171 : vector<8x1xi32>
    %173 = arith.andi %170, %172 : vector<8x1xi1>
    %174 = arith.extui %173 : vector<8x1xi1> to vector<8x1xi32>
    %175 = arith.sitofp %174 : vector<8x1xi32> to vector<8x1xf32>
    %176 = vector.broadcast %175 : vector<8x1xf32> to vector<8x32xf32>
    %177 = arith.mulf %166, %176 : vector<8x32xf32>
    %c6_i32 = arith.constant 6 : i32
    %178 = tpu.dynamic_rotate %117 by %c6_i32 dim 0 : vector<8x32xf32>, i32 -> vector<8x32xf32>
    %c2_i32_54 = arith.constant 2 : i32
    %179 = vector.broadcast %c2_i32_54 : i32 to vector<8x1xi32>
    %180 = arith.addi %26, %179 : vector<8x1xi32>
    %c0_i32_55 = arith.constant 0 : i32
    %181 = vector.broadcast %c0_i32_55 : i32 to vector<8x1xi32>
    %182 = arith.cmpi sge, %180, %181 : vector<8x1xi32>
    %c8_i32_56 = arith.constant 8 : i32
    %183 = vector.broadcast %c8_i32_56 : i32 to vector<8x1xi32>
    %184 = arith.cmpi slt, %180, %183 : vector<8x1xi32>
    %185 = arith.andi %182, %184 : vector<8x1xi1>
    %186 = arith.extui %185 : vector<8x1xi1> to vector<8x1xi32>
    %187 = arith.sitofp %186 : vector<8x1xi32> to vector<8x1xf32>
    %188 = vector.broadcast %187 : vector<8x1xf32> to vector<8x32xf32>
    %189 = arith.mulf %178, %188 : vector<8x32xf32>
    %c5_i32 = arith.constant 5 : i32
    %190 = tpu.dynamic_rotate %117 by %c5_i32 dim 0 : vector<8x32xf32>, i32 -> vector<8x32xf32>
    %c3_i32_57 = arith.constant 3 : i32
    %191 = vector.broadcast %c3_i32_57 : i32 to vector<8x1xi32>
    %192 = arith.addi %26, %191 : vector<8x1xi32>
    %c0_i32_58 = arith.constant 0 : i32
    %193 = vector.broadcast %c0_i32_58 : i32 to vector<8x1xi32>
    %194 = arith.cmpi sge, %192, %193 : vector<8x1xi32>
    %c8_i32_59 = arith.constant 8 : i32
    %195 = vector.broadcast %c8_i32_59 : i32 to vector<8x1xi32>
    %196 = arith.cmpi slt, %192, %195 : vector<8x1xi32>
    %197 = arith.andi %194, %196 : vector<8x1xi1>
    %198 = arith.extui %197 : vector<8x1xi1> to vector<8x1xi32>
    %199 = arith.sitofp %198 : vector<8x1xi32> to vector<8x1xf32>
    %200 = vector.broadcast %199 : vector<8x1xf32> to vector<8x32xf32>
    %201 = arith.mulf %190, %200 : vector<8x32xf32>
    %c4_i32_60 = arith.constant 4 : i32
    %202 = tpu.dynamic_rotate %117 by %c4_i32_60 dim 0 : vector<8x32xf32>, i32 -> vector<8x32xf32>
    %c4_i32_61 = arith.constant 4 : i32
    %203 = vector.broadcast %c4_i32_61 : i32 to vector<8x1xi32>
    %204 = arith.addi %26, %203 : vector<8x1xi32>
    %c0_i32_62 = arith.constant 0 : i32
    %205 = vector.broadcast %c0_i32_62 : i32 to vector<8x1xi32>
    %206 = arith.cmpi sge, %204, %205 : vector<8x1xi32>
    %c8_i32_63 = arith.constant 8 : i32
    %207 = vector.broadcast %c8_i32_63 : i32 to vector<8x1xi32>
    %208 = arith.cmpi slt, %204, %207 : vector<8x1xi32>
    %209 = arith.andi %206, %208 : vector<8x1xi1>
    %210 = arith.extui %209 : vector<8x1xi1> to vector<8x1xi32>
    %211 = arith.sitofp %210 : vector<8x1xi32> to vector<8x1xf32>
    %212 = vector.broadcast %211 : vector<8x1xf32> to vector<8x32xf32>
    %213 = arith.mulf %202, %212 : vector<8x32xf32>
    %214 = tpu.concatenate %129, %141, %153, %165, %117, %177, %189, %201, %213 in 1 : vector<8x32xf32>, vector<8x32xf32>, vector<8x32xf32>, vector<8x32xf32>, vector<8x32xf32>, vector<8x32xf32>, vector<8x32xf32>, vector<8x32xf32>, vector<8x32xf32> -> vector<8x288xf32>
    %215 = arith.truncf %214 : vector<8x288xf32> to vector<8x288xbf16>
    %c0_64 = arith.constant 0 : index
    %c0_65 = arith.constant 0 : index
    %216 = vector.load %arg9[%c0_64, %c0_65] : memref<288x64xbf16, #tpu.memory_space<vmem>>, vector<288x64xbf16>
    %cst_66 = arith.constant dense<0.000000e+00> : vector<8x64xf32>
    %217 = tpu.matmul %215, %216, %cst_66 {dimension_numbers = #tpu.dot_dimension_numbers<[1], [0], [0], [1], [0, 0, 1, 1], [], []>} : vector<8x288xbf16>, vector<288x64xbf16>, vector<8x64xf32> -> vector<8x64xf32>
    %c0_67 = arith.constant 0 : index
    %c0_68 = arith.constant 0 : index
    %218 = vector.load %arg10[%c0_67, %c0_68] : memref<1x64xf32, #tpu.memory_space<vmem>>, vector<1x64xf32>
    %219 = vector.broadcast %218 : vector<1x64xf32> to vector<8x64xf32>
    %220 = arith.addf %217, %219 : vector<8x64xf32>
    %cst_69 = arith.constant 0.000000e+00 : f32
    %221 = vector.broadcast %cst_69 : f32 to vector<8x64xf32>
    %222 = arith.maximumf %220, %221 : vector<8x64xf32>
    %223 = arith.truncf %222 : vector<8x64xf32> to vector<8x64xbf16>
    %c0_70 = arith.constant 0 : index
    %c0_71 = arith.constant 0 : index
    %224 = vector.load %arg11[%c0_70, %c0_71] : memref<64x32xbf16, #tpu.memory_space<vmem>>, vector<64x32xbf16>
    %cst_72 = arith.constant dense<0.000000e+00> : vector<8x32xf32>
    %225 = tpu.matmul %223, %224, %cst_72 {dimension_numbers = #tpu.dot_dimension_numbers<[1], [0], [0], [1], [0, 0, 1, 1], [], []>} : vector<8x64xbf16>, vector<64x32xbf16>, vector<8x32xf32> -> vector<8x32xf32>
    %c0_73 = arith.constant 0 : index
    %c0_74 = arith.constant 0 : index
    %226 = vector.load %arg12[%c0_73, %c0_74] : memref<1x32xf32, #tpu.memory_space<vmem>>, vector<1x32xf32>
    %227 = vector.broadcast %226 : vector<1x32xf32> to vector<8x32xf32>
    %228 = arith.addf %225, %227 : vector<8x32xf32>
    %229 = arith.addf %228, %117 : vector<8x32xf32>
    %c0_75 = arith.constant 0 : index
    %c0_76 = arith.constant 0 : index
    %230 = vector.load %arg13[%c0_75, %c0_76] : memref<1x32xf32, #tpu.memory_space<vmem>>, vector<1x32xf32>
    %c0_77 = arith.constant 0 : index
    %c0_78 = arith.constant 0 : index
    %231 = vector.load %arg14[%c0_77, %c0_78] : memref<1x32xf32, #tpu.memory_space<vmem>>, vector<1x32xf32>
    %cst_79 = arith.constant dense<0.000000e+00> : vector<8xf32>
    %232 = vector.multi_reduction <add>, %229, %cst_79 [1] : vector<8x32xf32> to vector<8xf32>
    %233 = vector.shape_cast %232 : vector<8xf32> to vector<8x1xf32>
    %cst_80 = arith.constant 3.200000e+01 : f32
    %234 = vector.broadcast %cst_80 : f32 to vector<8x1xf32>
    %235 = arith.divf %233, %234 : vector<8x1xf32>
    %236 = vector.broadcast %235 : vector<8x1xf32> to vector<8x32xf32>
    %237 = arith.subf %229, %236 : vector<8x32xf32>
    %238 = arith.mulf %237, %237 : vector<8x32xf32>
    %cst_81 = arith.constant dense<0.000000e+00> : vector<8xf32>
    %239 = vector.multi_reduction <add>, %238, %cst_81 [1] : vector<8x32xf32> to vector<8xf32>
    %240 = vector.shape_cast %239 : vector<8xf32> to vector<8x1xf32>
    %cst_82 = arith.constant 3.200000e+01 : f32
    %241 = vector.broadcast %cst_82 : f32 to vector<8x1xf32>
    %242 = arith.divf %240, %241 : vector<8x1xf32>
    %243 = vector.broadcast %235 : vector<8x1xf32> to vector<8x32xf32>
    %244 = arith.subf %229, %243 : vector<8x32xf32>
    %cst_83 = arith.constant 9.99999974E-6 : f32
    %245 = vector.broadcast %cst_83 : f32 to vector<8x1xf32>
    %246 = arith.addf %242, %245 : vector<8x1xf32>
    %247 = math.rsqrt %246 : vector<8x1xf32>
    %248 = vector.broadcast %247 : vector<8x1xf32> to vector<8x32xf32>
    %249 = arith.mulf %244, %248 : vector<8x32xf32>
    %250 = vector.broadcast %230 : vector<1x32xf32> to vector<8x32xf32>
    %251 = arith.mulf %249, %250 : vector<8x32xf32>
    %252 = vector.broadcast %231 : vector<1x32xf32> to vector<8x32xf32>
    %253 = arith.addf %251, %252 : vector<8x32xf32>
    %254 = vector.broadcast %25 : vector<8x1xf32> to vector<8x32xf32>
    %255 = arith.mulf %253, %254 : vector<8x32xf32>
    %256 = vector.shape_cast %255 : vector<8x32xf32> to vector<1x8x32xf32>
    %c0_84 = arith.constant 0 : index
    %c0_85 = arith.constant 0 : index
    %c0_86 = arith.constant 0 : index
    %257 = vector.load %arg15[%c0_84, %c0_85, %c0_86] : memref<1x8x32xf32, #tpu.memory_space<vmem>>, vector<1x8x32xf32>
    tpu.vector_store %arg15[%c0_84, %c0_85, %c0_86], %256 {strides = array<i32>} : memref<1x8x32xf32, #tpu.memory_space<vmem>>, vector<1x8x32xf32>,
    return
  }
  func.func @transform_0(%arg0: i32, %arg1: memref<2xi32, #tpu.memory_space<smem>>) -> (i32, i32, i32) {
    %c0_i32 = arith.constant 0 : i32
    %c0_i32_0 = arith.constant 0 : i32
    %c0_i32_1 = arith.constant 0 : i32
    return %arg0, %c0_i32, %c0_i32_0 : i32, i32, i32
  }
  func.func @transform_1(%arg0: i32, %arg1: memref<2xi32, #tpu.memory_space<smem>>) -> (i32, i32) {
    %c0_i32 = arith.constant 0 : i32
    %c0_i32_0 = arith.constant 0 : i32
    %c0_i32_1 = arith.constant 0 : i32
    return %c0_i32, %c0_i32_0 : i32, i32
  }
  func.func @transform_2(%arg0: i32, %arg1: memref<2xi32, #tpu.memory_space<smem>>) -> (i32, i32) {
    %c0_i32 = arith.constant 0 : i32
    %c0_i32_0 = arith.constant 0 : i32
    %c0_i32_1 = arith.constant 0 : i32
    return %c0_i32, %c0_i32_0 : i32, i32
  }
  func.func @transform_3(%arg0: i32, %arg1: memref<2xi32, #tpu.memory_space<smem>>) -> (i32, i32) {
    %c0_i32 = arith.constant 0 : i32
    %c0_i32_0 = arith.constant 0 : i32
    %c0_i32_1 = arith.constant 0 : i32
    return %c0_i32, %c0_i32_0 : i32, i32
  }
  func.func @transform_4(%arg0: i32, %arg1: memref<2xi32, #tpu.memory_space<smem>>) -> (i32, i32) {
    %c0_i32 = arith.constant 0 : i32
    %c0_i32_0 = arith.constant 0 : i32
    %c0_i32_1 = arith.constant 0 : i32
    return %c0_i32, %c0_i32_0 : i32, i32
  }
  func.func @transform_5(%arg0: i32, %arg1: memref<2xi32, #tpu.memory_space<smem>>) -> (i32, i32) {
    %c0_i32 = arith.constant 0 : i32
    %c0_i32_0 = arith.constant 0 : i32
    %c0_i32_1 = arith.constant 0 : i32
    return %c0_i32, %c0_i32_0 : i32, i32
  }
  func.func @transform_6(%arg0: i32, %arg1: memref<2xi32, #tpu.memory_space<smem>>) -> (i32, i32) {
    %c0_i32 = arith.constant 0 : i32
    %c0_i32_0 = arith.constant 0 : i32
    %c0_i32_1 = arith.constant 0 : i32
    return %c0_i32, %c0_i32_0 : i32, i32
  }
  func.func @transform_7(%arg0: i32, %arg1: memref<2xi32, #tpu.memory_space<smem>>) -> (i32, i32) {
    %c0_i32 = arith.constant 0 : i32
    %c0_i32_0 = arith.constant 0 : i32
    %c0_i32_1 = arith.constant 0 : i32
    return %c0_i32, %c0_i32_0 : i32, i32
  }
  func.func @transform_8(%arg0: i32, %arg1: memref<2xi32, #tpu.memory_space<smem>>) -> (i32, i32) {
    %c0_i32 = arith.constant 0 : i32
    %c0_i32_0 = arith.constant 0 : i32
    %c0_i32_1 = arith.constant 0 : i32
    return %c0_i32, %c0_i32_0 : i32, i32
  }
  func.func @transform_9(%arg0: i32, %arg1: memref<2xi32, #tpu.memory_space<smem>>) -> (i32, i32) {
    %c0_i32 = arith.constant 0 : i32
    %c0_i32_0 = arith.constant 0 : i32
    %c0_i32_1 = arith.constant 0 : i32
    return %c0_i32, %c0_i32_0 : i32, i32
  }
  func.func @transform_10(%arg0: i32, %arg1: memref<2xi32, #tpu.memory_space<smem>>) -> (i32, i32) {
    %c0_i32 = arith.constant 0 : i32
    %c0_i32_0 = arith.constant 0 : i32
    %c0_i32_1 = arith.constant 0 : i32
    return %c0_i32, %c0_i32_0 : i32, i32
  }
  func.func @transform_11(%arg0: i32, %arg1: memref<2xi32, #tpu.memory_space<smem>>) -> (i32, i32) {
    %c0_i32 = arith.constant 0 : i32
    %c0_i32_0 = arith.constant 0 : i32
    %c0_i32_1 = arith.constant 0 : i32
    return %c0_i32, %c0_i32_0 : i32, i32
  }
  func.func @transform_12(%arg0: i32, %arg1: memref<2xi32, #tpu.memory_space<smem>>) -> (i32, i32) {
    %c0_i32 = arith.constant 0 : i32
    %c0_i32_0 = arith.constant 0 : i32
    %c0_i32_1 = arith.constant 0 : i32
    return %c0_i32, %c0_i32_0 : i32, i32
  }
  func.func @transform_13(%arg0: i32, %arg1: memref<2xi32, #tpu.memory_space<smem>>) -> (i32, i32, i32) {
    %c0_i32 = arith.constant 0 : i32
    %c0_i32_0 = arith.constant 0 : i32
    %c0_i32_1 = arith.constant 0 : i32
    return %arg0, %c0_i32, %c0_i32_0 : i32, i32, i32
  }
  func.func @transform_14(%arg0: i32, %arg1: memref<2xi32, #tpu.memory_space<smem>>) -> (i32, i32, i32, i32) {
    %c0_i32 = arith.constant 0 : i32
    %c0_i32_0 = arith.constant 0 : i32
    %c0_i32_1 = arith.constant 0 : i32
    %c0_i32_2 = arith.constant 0 : i32
    return %c0_i32, %arg0, %c0_i32_0, %c0_i32_1 : i32, i32, i32, i32
  }
}

</mosaic_0001>

<llo_original>
// kernel: tpu_custom_call.1
$region0: #{tpu_custom_call.1}
  #allocation0 [shape = 'u32[]', space=smem, size = 0x4, offset = 0x4, fixed_abs, tag = 'smem constant byte address 0x4 - core index']
  #allocation1 [shape = 'u32[144,128]{1,0:T(1,128)}', space=vmem, size = 0x12000, scoped, tag = 'internal scratch']
  #allocation2 [shape = 's32[1]{0}', space=sflag, size = 0x4, scoped, tag = 'scoped memory for tpu_custom_call.1']
  #allocation3 [shape = 'u8[512]{0}', space=smem, size = 0x200, scoped, tag = 'prefetched SMEM operand 0']
  %s0 = inlined_call_operand.vmem [shape: s32[2], index: 0, kind: input, shape index: {}]
  %s1 = inlined_call_operand.vmem [shape: f32[2,8,32], index: 1, kind: input, shape index: {}]
  %s2 = inlined_call_operand.vmem [shape: bf16[32,96], index: 2, kind: input, shape index: {}]
  %s3 = inlined_call_operand.vmem [shape: f32[1,96], index: 3, kind: input, shape index: {}]
  %s4 = inlined_call_operand.vmem [shape: bf16[32,32], index: 4, kind: input, shape index: {}]
  %s5 = inlined_call_operand.vmem [shape: f32[1,32], index: 5, kind: input, shape index: {}]
  %s6 = inlined_call_operand.vmem [shape: f32[1,32], index: 6, kind: input, shape index: {}]
  %s7 = inlined_call_operand.vmem [shape: f32[1,32], index: 7, kind: input, shape index: {}]
  %s8 = inlined_call_operand.vmem [shape: bf16[288,64], index: 8, kind: input, shape index: {}]
  %s9 = inlined_call_operand.vmem [shape: f32[1,64], index: 9, kind: input, shape index: {}]
  %s10 = inlined_call_operand.vmem [shape: bf16[64,32], index: 10, kind: input, shape index: {}]
  %s11 = inlined_call_operand.vmem [shape: f32[1,32], index: 11, kind: input, shape index: {}]
  %s12 = inlined_call_operand.vmem [shape: f32[1,32], index: 12, kind: input, shape index: {}]
  %s13 = inlined_call_operand.vmem [shape: f32[1,32], index: 13, kind: input, shape index: {}]
  %s14 = inlined_call_operand.hbm [shape: f32[2,8,32], index: 14, kind: output, shape index: {0}]
  %s15 = inlined_call_operand.hbm [shape: f32[2,2,8,8], index: 15, kind: output, shape index: {1}]
  %16 = xla_tuple %s14, %s15
  %s17 = sld [smem:[#allocation0]]
  $region93: #{tpu_custom_call.1} parent=0
    _
  %s19 = ssub.s32 1, %s17
  %s20 = scalar_select 0, %s19, %s17
  %s21 = sshll.u32 %s0, 4
  %s22 = int_to_ptr.vmem [resolvable:$true] %s21
  %24 = dma.vmem_to_smem %s22, 16, [#allocation3], [#allocation2]
  %25 = dma.done [#allocation2], 16
  %26 = sfence
  $region1: #{tpu_custom_call.1} parent=0
    #allocation4 [shape = 'u8[8192]{0}', space=vmem, size = 0x2000, scoped, tag = 'output window, operand 0']
    #allocation5 [shape = 's32[2]{0}', space=sflag, size = 0x8, scoped, tag = 'scoped memory for tpu_custom_call.1']
    #allocation6 [shape = 'u8[16384]{0}', space=vmem, size = 0x4000, scoped, tag = 'output window, operand 1']
    #allocation7 [shape = 's32[2]{0}', space=sflag, size = 0x8, scoped, tag = 'scoped memory for tpu_custom_call.1']
    %27 = vsyncpa [#allocation5], 0
    %s28 = scalar_lea.sflag [#allocation5], 1
    %29 = vsyncpa %s28, 0
    %30 = vsyncpa [#allocation7], 0
    %s31 = scalar_lea.sflag [#allocation7], 1
    %32 = vsyncpa %s31, 0
    loop: start=0, step=1, limit=4
    $region2: #{tpu_custom_call.1} parent=1 // loop_pre_header
      _
    $region3: #{tpu_custom_call.1} parent=1 // loop_header
      %s34 = sphi 0, %s38
      %p35 = scmp.ge.s32.totalorder %s34, 4
      %s44 = sphi 0, %s46
      %s47 = sphi 0, %s44
      %s48 = sphi 0, %s47
      %s64 = sphi 0, %s48
      %s68 = sphi 0, %s68
      %s70 = sphi 0, %s68
      %s71 = sphi 0, %s70
      %s85 = sphi 0, %s71
      %s89 = sphi 0, %s89
      %s91 = sphi 0, %s89
      %s92 = sphi 0, %s91
      %s106 = sphi 0, %s92
      %s110 = sphi 0, %s110
      %s112 = sphi 0, %s110
      %s113 = sphi 0, %s112
      %s127 = sphi 0, %s113
      %s131 = sphi 0, %s131
      %s133 = sphi 0, %s131
      %s134 = sphi 0, %s133
      %s148 = sphi 0, %s134
      %s152 = sphi 0, %s152
      %s154 = sphi 0, %s152
      %s155 = sphi 0, %s154
      %s169 = sphi 0, %s155
      %s173 = sphi 0, %s173
      %s175 = sphi 0, %s173
      %s176 = sphi 0, %s175
      %s190 = sphi 0, %s176
      %s194 = sphi 0, %s194
      %s196 = sphi 0, %s194
      %s197 = sphi 0, %s196
      %s211 = sphi 0, %s197
      %s215 = sphi 0, %s215
      %s217 = sphi 0, %s215
      %s218 = sphi 0, %s217
      %s232 = sphi 0, %s218
      %s236 = sphi 0, %s236
      %s238 = sphi 0, %s236
      %s239 = sphi 0, %s238
      %s253 = sphi 0, %s239
      %s257 = sphi 0, %s257
      %s259 = sphi 0, %s257
      %s260 = sphi 0, %s259
      %s274 = sphi 0, %s260
      %s278 = sphi 0, %s278
      %s280 = sphi 0, %s278
      %s281 = sphi 0, %s280
      %s295 = sphi 0, %s281
      %s299 = sphi 0, %s299
      %s301 = sphi 0, %s299
      %s302 = sphi 0, %s301
      %s316 = sphi 0, %s302
      %s322 = sphi 0, %s324
      %s325 = sphi 0, %s322
      %s326 = sphi 0, %s325
      %s342 = sphi 0, %s326
      %s348 = sphi 0, %s350
      %s351 = sphi 0, %s348
      %s352 = sphi 0, %s351
      %s368 = sphi 0, %s352
    $region4: #{tpu_custom_call.1} parent=1 // loop_header_branch
      %37 = sbr.rel (%p35) target = $region8
    $region5: #{tpu_custom_call.1} parent=1 // loop_body
      %s39 = ssub.s32 %s34, 1
      %s40 = ssub.s32 %s34, 2
      %s41 = sadd.s32 %s34, 1
      %s42 = ssub.s32 %s34, %s41
      %p43 = scmp.eq.s32.totalorder %s42, 0
      %s45 = sadd.s32 %s44, 1
      %s46 = scalar_select %p43, %s44, %s45
      %p49 = pneg %p43
      %p50 = scmp.eq.s32.totalorder %s34, 1
      %p51 = por %p49, %p50
      %p52 = scmp.ne.s32.totalorder %s44, %s47
      %p53 = scmp.eq.s32.totalorder %s34, 0
      %p54 = por %p52, %p53
      %p55 = scmp.ne.s32.totalorder %s44, %s47
      %p56 = scmp.eq.s32.totalorder %s39, 1
      %p57 = por %p55, %p56
      %p58 = scmp.ne.s32.totalorder %s47, %s48
      %p59 = scmp.eq.s32.totalorder %s39, 0
      %p60 = por %p58, %p59
      %p61 = scmp.ne.s32.totalorder %s47, %s48
      %p62 = scmp.eq.s32.totalorder %s40, 1
      %p63 = por %p61, %p62
      %p65 = scmp.ne.s32.totalorder %s48, %s64
      %p66 = scmp.eq.s32.totalorder %s40, 0
      %p67 = por %p65, %p66
      %s69 = sadd.s32 %s68, 1
      %p72 = scmp.eq.s32.totalorder %s34, 1
      %p73 = scmp.ne.s32.totalorder %s68, %s70
      %p74 = scmp.eq.s32.totalorder %s34, 0
      %p75 = por %p73, %p74
      %p76 = scmp.ne.s32.totalorder %s68, %s70
      %p77 = scmp.eq.s32.totalorder %s39, 1
      %p78 = por %p76, %p77
      %p79 = scmp.ne.s32.totalorder %s70, %s71
      %p80 = scmp.eq.s32.totalorder %s39, 0
      %p81 = por %p79, %p80
      %p82 = scmp.ne.s32.totalorder %s70, %s71
      %p83 = scmp.eq.s32.totalorder %s40, 1
      %p84 = por %p82, %p83
      %p86 = scmp.ne.s32.totalorder %s71, %s85
      %p87 = scmp.eq.s32.totalorder %s40, 0
      %p88 = por %p86, %p87
      %s90 = sadd.s32 %s89, 1
      %p93 = scmp.eq.s32.totalorder %s34, 1
      %p94 = scmp.ne.s32.totalorder %s89, %s91
      %p95 = scmp.eq.s32.totalorder %s34, 0
      %p96 = por %p94, %p95
      %p97 = scmp.ne.s32.totalorder %s89, %s91
      %p98 = scmp.eq.s32.totalorder %s39, 1
      %p99 = por %p97, %p98
      %p100 = scmp.ne.s32.totalorder %s91, %s92
      %p101 = scmp.eq.s32.totalorder %s39, 0
      %p102 = por %p100, %p101
      %p103 = scmp.ne.s32.totalorder %s91, %s92
      %p104 = scmp.eq.s32.totalorder %s40, 1
      %p105 = por %p103, %p104
      %p107 = scmp.ne.s32.totalorder %s92, %s106
      %p108 = scmp.eq.s32.totalorder %s40, 0
      %p109 = por %p107, %p108
      %s111 = sadd.s32 %s110, 1
      %p114 = scmp.eq.s32.totalorder %s34, 1
      %p115 = scmp.ne.s32.totalorder %s110, %s112
      %p116 = scmp.eq.s32.totalorder %s34, 0
      %p117 = por %p115, %p116
      %p118 = scmp.ne.s32.totalorder %s110, %s112
      %p119 = scmp.eq.s32.totalorder %s39, 1
      %p120 = por %p118, %p119
      %p121 = scmp.ne.s32.totalorder %s112, %s113
      %p122 = scmp.eq.s32.totalorder %s39, 0
      %p123 = por %p121, %p122
      %p124 = scmp.ne.s32.totalorder %s112, %s113
      %p125 = scmp.eq.s32.totalorder %s40, 1
      %p126 = por %p124, %p125
      %p128 = scmp.ne.s32.totalorder %s113, %s127
      %p129 = scmp.eq.s32.totalorder %s40, 0
      %p130 = por %p128, %p129
      %s132 = sadd.s32 %s131, 1
      %p135 = scmp.eq.s32.totalorder %s34, 1
      %p136 = scmp.ne.s32.totalorder %s131, %s133
      %p137 = scmp.eq.s32.totalorder %s34, 0
      %p138 = por %p136, %p137
      %p139 = scmp.ne.s32.totalorder %s131, %s133
      %p140 = scmp.eq.s32.totalorder %s39, 1
      %p141 = por %p139, %p140
      %p142 = scmp.ne.s32.totalorder %s133, %s134
      %p143 = scmp.eq.s32.totalorder %s39, 0
      %p144 = por %p142, %p143
      %p145 = scmp.ne.s32.totalorder %s133, %s134
      %p146 = scmp.eq.s32.totalorder %s40, 1
      %p147 = por %p145, %p146
      %p149 = scmp.ne.s32.totalorder %s134, %s148
      %p150 = scmp.eq.s32.totalorder %s40, 0
      %p151 = por %p149, %p150
      %s153 = sadd.s32 %s152, 1
      %p156 = scmp.eq.s32.totalorder %s34, 1
      %p157 = scmp.ne.s32.totalorder %s152, %s154
      %p158 = scmp.eq.s32.totalorder %s34, 0
      %p159 = por %p157, %p158
      %p160 = scmp.ne.s32.totalorder %s152, %s154
      %p161 = scmp.eq.s32.totalorder %s39, 1
      %p162 = por %p160, %p161
      %p163 = scmp.ne.s32.totalorder %s154, %s155
      %p164 = scmp.eq.s32.totalorder %s39, 0
      %p165 = por %p163, %p164
      %p166 = scmp.ne.s32.totalorder %s154, %s155
      %p167 = scmp.eq.s32.totalorder %s40, 1
      %p168 = por %p166, %p167
      %p170 = scmp.ne.s32.totalorder %s155, %s169
      %p171 = scmp.eq.s32.totalorder %s40, 0
      %p172 = por %p170, %p171
      %s174 = sadd.s32 %s173, 1
      %p177 = scmp.eq.s32.totalorder %s34, 1
      %p178 = scmp.ne.s32.totalorder %s173, %s175
      %p179 = scmp.eq.s32.totalorder %s34, 0
      %p180 = por %p178, %p179
      %p181 = scmp.ne.s32.totalorder %s173, %s175
      %p182 = scmp.eq.s32.totalorder %s39, 1
      %p183 = por %p181, %p182
      %p184 = scmp.ne.s32.totalorder %s175, %s176
      %p185 = scmp.eq.s32.totalorder %s39, 0
      %p186 = por %p184, %p185
      %p187 = scmp.ne.s32.totalorder %s175, %s176
      %p188 = scmp.eq.s32.totalorder %s40, 1
      %p189 = por %p187, %p188
      %p191 = scmp.ne.s32.totalorder %s176, %s190
      %p192 = scmp.eq.s32.totalorder %s40, 0
      %p193 = por %p191, %p192
      %s195 = sadd.s32 %s194, 1
      %p198 = scmp.eq.s32.totalorder %s34, 1
      %p199 = scmp.ne.s32.totalorder %s194, %s196
      %p200 = scmp.eq.s32.totalorder %s34, 0
      %p201 = por %p199, %p200
      %p202 = scmp.ne.s32.totalorder %s194, %s196
      %p203 = scmp.eq.s32.totalorder %s39, 1
      %p204 = por %p202, %p203
      %p205 = scmp.ne.s32.totalorder %s196, %s197
      %p206 = scmp.eq.s32.totalorder %s39, 0
      %p207 = por %p205, %p206
      %p208 = scmp.ne.s32.totalorder %s196, %s197
      %p209 = scmp.eq.s32.totalorder %s40, 1
      %p210 = por %p208, %p209
      %p212 = scmp.ne.s32.totalorder %s197, %s211
      %p213 = scmp.eq.s32.totalorder %s40, 0
      %p214 = por %p212, %p213
      %s216 = sadd.s32 %s215, 1
      %p219 = scmp.eq.s32.totalorder %s34, 1
      %p220 = scmp.ne.s32.totalorder %s215, %s217
      %p221 = scmp.eq.s32.totalorder %s34, 0
      %p222 = por %p220, %p221
      %p223 = scmp.ne.s32.totalorder %s215, %s217
      %p224 = scmp.eq.s32.totalorder %s39, 1
      %p225 = por %p223, %p224
      %p226 = scmp.ne.s32.totalorder %s217, %s218
      %p227 = scmp.eq.s32.totalorder %s39, 0
      %p228 = por %p226, %p227
      %p229 = scmp.ne.s32.totalorder %s217, %s218
      %p230 = scmp.eq.s32.totalorder %s40, 1
      %p231 = por %p229, %p230
      %p233 = scmp.ne.s32.totalorder %s218, %s232
      %p234 = scmp.eq.s32.totalorder %s40, 0
      %p235 = por %p233, %p234
      %s237 = sadd.s32 %s236, 1
      %p240 = scmp.eq.s32.totalorder %s34, 1
      %p241 = scmp.ne.s32.totalorder %s236, %s238
      %p242 = scmp.eq.s32.totalorder %s34, 0
      %p243 = por %p241, %p242
      %p244 = scmp.ne.s32.totalorder %s236, %s238
      %p245 = scmp.eq.s32.totalorder %s39, 1
      %p246 = por %p244, %p245
      %p247 = scmp.ne.s32.totalorder %s238, %s239
      %p248 = scmp.eq.s32.totalorder %s39, 0
      %p249 = por %p247, %p248
      %p250 = scmp.ne.s32.totalorder %s238, %s239
      %p251 = scmp.eq.s32.totalorder %s40, 1
      %p252 = por %p250, %p251
      %p254 = scmp.ne.s32.totalorder %s239, %s253
      %p255 = scmp.eq.s32.totalorder %s40, 0
      %p256 = por %p254, %p255
      %s258 = sadd.s32 %s257, 1
      %p261 = scmp.eq.s32.totalorder %s34, 1
      %p262 = scmp.ne.s32.totalorder %s257, %s259
      %p263 = scmp.eq.s32.totalorder %s34, 0
      %p264 = por %p262, %p263
      %p265 = scmp.ne.s32.totalorder %s257, %s259
      %p266 = scmp.eq.s32.totalorder %s39, 1
      %p267 = por %p265, %p266
      %p268 = scmp.ne.s32.totalorder %s259, %s260
      %p269 = scmp.eq.s32.totalorder %s39, 0
      %p270 = por %p268, %p269
      %p271 = scmp.ne.s32.totalorder %s259, %s260
      %p272 = scmp.eq.s32.totalorder %s40, 1
      %p273 = por %p271, %p272
      %p275 = scmp.ne.s32.totalorder %s260, %s274
      %p276 = scmp.eq.s32.totalorder %s40, 0
      %p277 = por %p275, %p276
      %s279 = sadd.s32 %s278, 1
      %p282 = scmp.eq.s32.totalorder %s34, 1
      %p283 = scmp.ne.s32.totalorder %s278, %s280
      %p284 = scmp.eq.s32.totalorder %s34, 0
      %p285 = por %p283, %p284
      %p286 = scmp.ne.s32.totalorder %s278, %s280
      %p287 = scmp.eq.s32.totalorder %s39, 1
      %p288 = por %p286, %p287
      %p289 = scmp.ne.s32.totalorder %s280, %s281
      %p290 = scmp.eq.s32.totalorder %s39, 0
      %p291 = por %p289, %p290
      %p292 = scmp.ne.s32.totalorder %s280, %s281
      %p293 = scmp.eq.s32.totalorder %s40, 1
      %p294 = por %p292, %p293
      %p296 = scmp.ne.s32.totalorder %s281, %s295
      %p297 = scmp.eq.s32.totalorder %s40, 0
      %p298 = por %p296, %p297
      %s300 = sadd.s32 %s299, 1
      %p303 = scmp.eq.s32.totalorder %s34, 1
      %p304 = scmp.ne.s32.totalorder %s299, %s301
      %p305 = scmp.eq.s32.totalorder %s34, 0
      %p306 = por %p304, %p305
      %p307 = scmp.ne.s32.totalorder %s299, %s301
      %p308 = scmp.eq.s32.totalorder %s39, 1
      %p309 = por %p307, %p308
      %p310 = scmp.ne.s32.totalorder %s301, %s302
      %p311 = scmp.eq.s32.totalorder %s39, 0
      %p312 = por %p310, %p311
      %p313 = scmp.ne.s32.totalorder %s301, %s302
      %p314 = scmp.eq.s32.totalorder %s40, 1
      %p315 = por %p313, %p314
      %p317 = scmp.ne.s32.totalorder %s302, %s316
      %p318 = scmp.eq.s32.totalorder %s40, 0
      %p319 = por %p317, %p318
      %s320 = ssub.s32 %s34, %s41
      %p321 = scmp.eq.s32.totalorder %s320, 0
      %s323 = sadd.s32 %s322, 1
      %s324 = scalar_select %p321, %s322, %s323
      %p327 = pneg %p321
      %p328 = scmp.eq.s32.totalorder %s34, 1
      %p329 = por %p327, %p328
      %p330 = scmp.ne.s32.totalorder %s322, %s325
      %p331 = scmp.eq.s32.totalorder %s34, 0
      %p332 = por %p330, %p331
      %p333 = scmp.ne.s32.totalorder %s322, %s325
      %p334 = scmp.eq.s32.totalorder %s39, 1
      %p335 = por %p333, %p334
      %p336 = scmp.ne.s32.totalorder %s325, %s326
      %p337 = scmp.eq.s32.totalorder %s39, 0
      %p338 = por %p336, %p337
      %p339 = scmp.ne.s32.totalorder %s325, %s326
      %p340 = scmp.eq.s32.totalorder %s40, 1
      %p341 = por %p339, %p340
      %p343 = scmp.ne.s32.totalorder %s326, %s342
      %p344 = scmp.eq.s32.totalorder %s40, 0
      %p345 = por %p343, %p344
      %s346 = ssub.s32 %s34, %s41
      %p347 = scmp.eq.s32.totalorder %s346, 0
      %s349 = sadd.s32 %s348, 1
      %s350 = scalar_select %p347, %s348, %s349
      %p353 = pneg %p347
      %p354 = scmp.eq.s32.totalorder %s34, 1
      %p355 = por %p353, %p354
      %p356 = scmp.ne.s32.totalorder %s348, %s351
      %p357 = scmp.eq.s32.totalorder %s34, 0
      %p358 = por %p356, %p357
      %p359 = scmp.ne.s32.totalorder %s348, %s351
      %p360 = scmp.eq.s32.totalorder %s39, 1
      %p361 = por %p359, %p360
      %p362 = scmp.ne.s32.totalorder %s351, %s352
      %p363 = scmp.eq.s32.totalorder %s39, 0
      %p364 = por %p362, %p363
      %p365 = scmp.ne.s32.totalorder %s351, %s352
      %p366 = scmp.eq.s32.totalorder %s40, 1
      %p367 = por %p365, %p366
      %p369 = scmp.ne.s32.totalorder %s352, %s368
      %p370 = scmp.eq.s32.totalorder %s40, 0
      %p371 = por %p369, %p370
      %p372 = scmp.le.s32.totalorder 1, %s34
      %p373 = scmp.lt.s32.totalorder %s34, 3
      %p374 = pnand %p372, %p373
      %p375 = pneg %p374
      // Predicated region
      $region9: #{tpu_custom_call.1} parent=5 // pred_check
        _
      $region10: #{tpu_custom_call.1} parent=5 // pred_check_branch
        %377 = sbr.rel (%p374) target = $region12
      $region11: #{tpu_custom_call.1} parent=5 // pred_region
        %s378 = ssub.s32 %s34, 1
        // Predicated region
        $region13: #{tpu_custom_call.1} parent=11 // pred_check
          %p379 = pneg %p81
        $region14: #{tpu_custom_call.1} parent=11 // pred_check_branch
          %381 = sbr.rel (%p379) target = $region16
        $region15: #{tpu_custom_call.1} parent=11 // pred_region
          _
        $region16: #{tpu_custom_call.1} parent=11 // pred_fallthru
          _
        // Predicated region
        $region17: #{tpu_custom_call.1} parent=11 // pred_check
          %p382 = pneg %p102
        $region18: #{tpu_custom_call.1} parent=11 // pred_check_branch
          %384 = sbr.rel (%p382) target = $region20
        $region19: #{tpu_custom_call.1} parent=11 // pred_region
          _
        $region20: #{tpu_custom_call.1} parent=11 // pred_fallthru
          _
        // Predicated region
        $region21: #{tpu_custom_call.1} parent=11 // pred_check
          %p385 = pneg %p123
        $region22: #{tpu_custom_call.1} parent=11 // pred_check_branch
          %387 = sbr.rel (%p385) target = $region24
        $region23: #{tpu_custom_call.1} parent=11 // pred_region
          _
        $region24: #{tpu_custom_call.1} parent=11 // pred_fallthru
          _
        // Predicated region
        $region25: #{tpu_custom_call.1} parent=11 // pred_check
          %p388 = pneg %p144
        $region26: #{tpu_custom_call.1} parent=11 // pred_check_branch
          %390 = sbr.rel (%p388) target = $region28
        $region27: #{tpu_custom_call.1} parent=11 // pred_region
          _
        $region28: #{tpu_custom_call.1} parent=11 // pred_fallthru
          _
        // Predicated region
        $region29: #{tpu_custom_call.1} parent=11 // pred_check
          %p391 = pneg %p165
        $region30: #{tpu_custom_call.1} parent=11 // pred_check_branch
          %393 = sbr.rel (%p391) target = $region32
        $region31: #{tpu_custom_call.1} parent=11 // pred_region
          _
        $region32: #{tpu_custom_call.1} parent=11 // pred_fallthru
          _
        // Predicated region
        $region33: #{tpu_custom_call.1} parent=11 // pred_check
          %p394 = pneg %p186
        $region34: #{tpu_custom_call.1} parent=11 // pred_check_branch
          %396 = sbr.rel (%p394) target = $region36
        $region35: #{tpu_custom_call.1} parent=11 // pred_region
          _
        $region36: #{tpu_custom_call.1} parent=11 // pred_fallthru
          _
        // Predicated region
        $region37: #{tpu_custom_call.1} parent=11 // pred_check
          %p397 = pneg %p207
        $region38: #{tpu_custom_call.1} parent=11 // pred_check_branch
          %399 = sbr.rel (%p397) target = $region40
        $region39: #{tpu_custom_call.1} parent=11 // pred_region
          _
        $region40: #{tpu_custom_call.1} parent=11 // pred_fallthru
          _
        // Predicated region
        $region41: #{tpu_custom_call.1} parent=11 // pred_check
          %p400 = pneg %p228
        $region42: #{tpu_custom_call.1} parent=11 // pred_check_branch
          %402 = sbr.rel (%p400) target = $region44
        $region43: #{tpu_custom_call.1} parent=11 // pred_region
          _
        $region44: #{tpu_custom_call.1} parent=11 // pred_fallthru
          _
        // Predicated region
        $region45: #{tpu_custom_call.1} parent=11 // pred_check
          %p403 = pneg %p249
        $region46: #{tpu_custom_call.1} parent=11 // pred_check_branch
          %405 = sbr.rel (%p403) target = $region48
        $region47: #{tpu_custom_call.1} parent=11 // pred_region
          _
        $region48: #{tpu_custom_call.1} parent=11 // pred_fallthru
          _
        // Predicated region
        $region49: #{tpu_custom_call.1} parent=11 // pred_check
          %p406 = pneg %p270
        $region50: #{tpu_custom_call.1} parent=11 // pred_check_branch
          %408 = sbr.rel (%p406) target = $region52
        $region51: #{tpu_custom_call.1} parent=11 // pred_region
          _
        $region52: #{tpu_custom_call.1} parent=11 // pred_fallthru
          _
        // Predicated region
        $region53: #{tpu_custom_call.1} parent=11 // pred_check
          %p409 = pneg %p291
        $region54: #{tpu_custom_call.1} parent=11 // pred_check_branch
          %411 = sbr.rel (%p409) target = $region56
        $region55: #{tpu_custom_call.1} parent=11 // pred_region
          _
        $region56: #{tpu_custom_call.1} parent=11 // pred_fallthru
          _
        // Predicated region
        $region57: #{tpu_custom_call.1} parent=11 // pred_check
          %p412 = pneg %p312
        $region58: #{tpu_custom_call.1} parent=11 // pred_check_branch
          %414 = sbr.rel (%p412) target = $region60
        $region59: #{tpu_custom_call.1} parent=11 // pred_region
          _
        $region60: #{tpu_custom_call.1} parent=11 // pred_fallthru
          _
      $region12: #{tpu_custom_call.1} parent=5 // pred_fallthru
        _
      %p415 = scmp.lt.s32.totalorder %s34, 2
      // Predicated region
      $region61: #{tpu_custom_call.1} parent=5 // pred_check
        %p416 = pneg %p415
      $region62: #{tpu_custom_call.1} parent=5 // pred_check_branch
        %418 = sbr.rel (%p416) target = $region64
      $region63: #{tpu_custom_call.1} parent=5 // pred_region
        // Predicated region
        $region65: #{tpu_custom_call.1} parent=63 // pred_check
          %p419 = pneg %p54
        $region66: #{tpu_custom_call.1} parent=63 // pred_check_branch
          %421 = sbr.rel (%p419) target = $region68
        $region67: #{tpu_custom_call.1} parent=63 // pred_region
          %p422 = scmp.lt.s32.totalorder %s34, 1
          %s423 = scalar_select %p422, %s34, 1
          %s424 = smul.addr %s423, 8
          %s425 = scalar_lea.vmem %s1, %s424
        $region68: #{tpu_custom_call.1} parent=63 // pred_fallthru
          _
      $region64: #{tpu_custom_call.1} parent=5 // pred_fallthru
        _
      %p426 = scmp.le.s32.totalorder 1, %s34
      %p427 = scmp.lt.s32.totalorder %s34, 3
      %p428 = pnand %p426, %p427
      %p429 = pneg %p428
      // Predicated region
      $region69: #{tpu_custom_call.1} parent=5 // pred_check
        _
      $region70: #{tpu_custom_call.1} parent=5 // pred_check_branch
        %431 = sbr.rel (%p428) target = $region72
      $region71: #{tpu_custom_call.1} parent=5 // pred_region
        %s432 = ssub.s32 %s34, 1
        %p433 = scmp.lt.s32.totalorder %s39, 1
        %s434 = scalar_select %p433, %s39, 1
        %s435 = smul.addr %s434, 8
        %s436 = scalar_lea.vmem %s1, %s435
        %p437 = pneg %p60
        %p438 = pneg %p57
        %p439 = pneg %p81
        %p440 = pneg %p78
        %p441 = pneg %p102
        %p442 = pneg %p99
        %p443 = pneg %p123
        %p444 = pneg %p120
        %p445 = pneg %p144
        %p446 = pneg %p141
        %p447 = pneg %p165
        %p448 = pneg %p162
        %p449 = pneg %p186
        %p450 = pneg %p183
        %p451 = pneg %p207
        %p452 = pneg %p204
        %p453 = pneg %p228
        %p454 = pneg %p225
        %p455 = pneg %p249
        %p456 = pneg %p246
        %p457 = pneg %p270
        %p458 = pneg %p267
        %p459 = pneg %p291
        %p460 = pneg %p288
        %p461 = pneg %p312
        %p462 = pneg %p309
        %p463 = pneg %p338
        %p464 = pneg %p335
        %s465 = sand.u32 %s325, 1
        %s466 = scalar_lea.sflag [#allocation5], %s465
        %s467 = sand.u32 %s325, 1
        %s468 = smul.addr %s467, 8
        %s469 = scalar_lea.vmem [#allocation4], %s468
        %p470 = pneg %p364
        %p471 = pneg %p361
        %s472 = sand.u32 %s351, 1
        %s473 = scalar_lea.sflag [#allocation7], %s472
        %s474 = sand.u32 %s351, 1
        %s475 = smul.addr %s474, 16
        %s476 = scalar_lea.vmem [#allocation6], %s475
        %p477 = scmp.lt.s32.totalorder %s39, 1
        %s478 = scalar_select %p477, %s39, 1
        %s479 = smul.addr %s478, 8
        %s480 = scalar_lea.vmem %s1, %s479
        %s482 = sld [smem:[#allocation3 + %s39]]
        %v483 = vlaneseq
        %v484 = vand.u32 %v483, 127
        %v485 = vstv %s482
        %vm486 = vcmp.ge.s32.totalorder %v484, %v485
        %v487 = vsel %vm486, -1e+30, 0.0
        %v488 = vlaneseq
        %v489 = vshrl.u32 %v488, 7
        %vm490 = vcmp.lt.s32.totalorder %v489, %v485
        %v491 = vsel %vm490, 1, 0
        %v492 = vcvt.s32.f32 %v491
        %v493 = vld [vmem:[%s480] sm:$0xff]
        %v494 = vpack.c.bf16 %v493, %v493
        %v495 = vld [vmem:[%s2] sm:$0xf]
        %v496 = vld [vmem:[%s2 + $0x4] sm:$0xf]
        %v497 = vld [vmem:[%s2 + $0x8] sm:$0xf]
        %v498 = vld [vmem:[%s2 + $0xc] sm:$0xf]
        %v499 = vld [vmem:[%s3] sm:$0x1]
        %v501 = vlaneseq
        %v502 = vshrl.u32 %v501, 7
        %v503 = vsub.s32 0, %v502
        %v504 = vrot.slane %v499, %v503
        %v510 = vunpack.c.l.b16 %v495
        %v511 = vunpack.c.l.b16 %v496
        %v512 = vunpack.c.l.b16 %v497
        %v513 = vunpack.c.l.b16 %v498
        %v514 = vpack.c.b16 %v511, %v510
        %v515 = vpack.c.b16 %v513, %v512
        %vm518 = vcmask 261120
        %v520 = vsel %vm518, %v494, 0
        %522 = vmatprep.subr.bf16.mxu0 0
        %523 = vmatpush1.bf16.msra.mxu0 %v514
        %524 = vmatprep.subr.bf16.mxu0 0
        %525 = vmatpush1.bf16.msra.mxu0 %v515
        %526 = vmatprep.subr.bf16.mxu0 0
        %527 = vmatpush1.bf16.msra.mxu0 0
        %528 = vmatprep.subr.bf16.mxu0 0
        %529 = vmatpush1.bf16.msra.mxu0 0
        %530 = vmatprep.subr.bf16.mxu0 0
        %531 = vmatpush1.bf16.msra.mxu0 0
        %532 = vmatprep.subr.bf16.mxu0 0
        %533 = vmatpush1.bf16.msra.mxu0 0
        %534 = vmatprep.subr.bf16.mxu0 0
        %535 = vmatpush1.bf16.msra.mxu0 0
        %536 = vmatprep.subr.bf16.mxu0 0
        %537 = vmatpush1.bf16.msra.mxu0 0
        %538 = vmatprep.subr.bf16.mxu0 0
        %539 = vmatpush1.bf16.msra.mxu0 0
        %540 = vmatprep.subr.bf16.mxu0 0
        %541 = vmatpush1.bf16.msra.mxu0 0
        %542 = vmatprep.subr.bf16.mxu0 0
        %543 = vmatpush1.bf16.msra.mxu0 0
        %544 = vmatprep.subr.bf16.mxu0 0
        %545 = vmatpush1.bf16.msra.mxu0 0
        %546 = vmatprep.subr.bf16.mxu0 0
        %547 = vmatpush1.bf16.msra.mxu0 0
        %548 = vmatprep.subr.bf16.mxu0 0
        %549 = vmatpush1.bf16.msra.mxu0 0
        %550 = vmatprep.subr.bf16.mxu0 0
        %551 = vmatpush1.bf16.msra.mxu0 0
        %552 = vmatprep.subr.bf16.mxu0 0
        %553 = vmatpush1.bf16.msra.mxu0 0
        %554 = vmatprep.mubr.bf16.mxu0 0
        %555 = vmatmul.mubr.bf16.gmra.mrb[0].mxu0 %v520
        %v556 = vpop.f32.mrb[0].mxu0
        %v557 = vadd.f32 %v504, %v556
        %v558 = vpop.f32.mrb[0].mxu0
        %v559 = vpop.f32.mrb[0].mxu0
        %v560 = vpop.f32.mrb[0].mxu0
        %561 = vdwg.mxu0
        %v562 = vpack.c.bf16 %v557, %v557
        %564 = vrot.lane.b32.xlu0 %v562, 96
        %v565 = vpop.permute.xlu0 %564
        %vm566 = vcmask 130048
        %v568 = vsel %vm566, %v562, 0
        %v571 = vsel %vm566, %v565, 0
        %573 = vmatprep.subr.bf16.mxu0 0
        %574 = vmatpush1.bf16.xpose.msra.mxu0 %v571
        %575 = vmatprep.subr.bf16.mxu0 0
        %576 = vmatpush1.bf16.xpose.msra.mxu0 0
        %577 = vmatprep.subr.bf16.mxu0 0
        %578 = vmatpush1.bf16.xpose.msra.mxu0 0
        %579 = vmatprep.subr.bf16.mxu0 0
        %580 = vmatpush1.bf16.xpose.msra.mxu0 0
        %581 = vmatprep.subr.bf16.mxu0 0
        %582 = vmatpush1.bf16.xpose.msra.mxu0 0
        %583 = vmatprep.subr.bf16.mxu0 0
        %584 = vmatpush1.bf16.xpose.msra.mxu0 0
        %585 = vmatprep.subr.bf16.mxu0 0
        %586 = vmatpush1.bf16.xpose.msra.mxu0 0
        %587 = vmatprep.subr.bf16.mxu0 0
        %588 = vmatpush1.bf16.xpose.msra.mxu0 0
        %589 = vmatprep.subr.bf16.mxu0 0
        %590 = vmatpush1.bf16.xpose.msra.mxu0 0
        %591 = vmatprep.subr.bf16.mxu0 0
        %592 = vmatpush1.bf16.xpose.msra.mxu0 0
        %593 = vmatprep.subr.bf16.mxu0 0
        %594 = vmatpush1.bf16.xpose.msra.mxu0 0
        %595 = vmatprep.subr.bf16.mxu0 0
        %596 = vmatpush1.bf16.xpose.msra.mxu0 0
        %597 = vmatprep.subr.bf16.mxu0 0
        %598 = vmatpush1.bf16.xpose.msra.mxu0 0
        %599 = vmatprep.subr.bf16.mxu0 0
        %600 = vmatpush1.bf16.xpose.msra.mxu0 0
        %601 = vmatprep.subr.bf16.mxu0 0
        %602 = vmatpush1.bf16.xpose.msra.mxu0 0
        %603 = vmatprep.subr.bf16.mxu0 0
        %604 = vmatpush1.bf16.xpose.msra.mxu0 0
        %605 = vmatprep.mubr.bf16.mxu0 0
        %606 = vmatmul.mubr.bf16.gmra.mrb[0].mxu0 %v568
        %v607 = vpop.f32.mrb[0].mxu0
        %v608 = vadd.f32 0.0, %v607
        %v609 = vpop.f32.mrb[0].mxu0
        %v610 = vpop.f32.mrb[0].mxu0
        %v611 = vpop.f32.mrb[0].mxu0
        %612 = vdwg.mxu0
        %v613 = vmul.f32 %v608, 0.25
        %v614 = vadd.f32 %v613, %v487
        %vm615 = vcmask 64512
        %v616 = vsel %vm615, %v614, -inf
        %617 = vmax.xlane.f32.xlu0 %v616
        %v618 = vpop.xlane.xlu0 %617
        %v619 = vsub.f32 %v614, %v618
        %v620 = vmul.f32 %v619, 1.442695
        %v621 = vpow.pop %v620
        %v622 = vsel %vm615, %v621, 0.0
        %623 = vadd.xlane.f32.xlu0 %v622
        %v624 = vpop.xlane.xlu0 %623
        %v625 = vrcp.pop %v624
        %v626 = vmul.f32 %v621, %v625
        %627 = vst.msk [vmem:[%s476] sm:$0xff] %vm615, %v626
        %v628 = vpack.c.bf16 %v626, %v626
        %629 = vrot.lane.b32.xlu0 %v562, 64
        %v630 = vpop.permute.xlu0 %629
        %v632 = vsel %vm615, %v628, 0
        %vm634 = vcmask 1043456
        %v636 = vsel %vm634, %v630, 0
        %638 = vmatprep.subr.bf16.mxu0 0
        %639 = vmatpush1.bf16.msra.mxu0 %v636
        %640 = vmatprep.subr.bf16.mxu0 0
        %641 = vmatpush1.bf16.msra.mxu0 0
        %642 = vmatprep.subr.bf16.mxu0 0
        %643 = vmatpush1.bf16.msra.mxu0 0
        %644 = vmatprep.subr.bf16.mxu0 0
        %645 = vmatpush1.bf16.msra.mxu0 0
        %646 = vmatprep.subr.bf16.mxu0 0
        %647 = vmatpush1.bf16.msra.mxu0 0
        %648 = vmatprep.subr.bf16.mxu0 0
        %649 = vmatpush1.bf16.msra.mxu0 0
        %650 = vmatprep.subr.bf16.mxu0 0
        %651 = vmatpush1.bf16.msra.mxu0 0
        %652 = vmatprep.subr.bf16.mxu0 0
        %653 = vmatpush1.bf16.msra.mxu0 0
        %654 = vmatprep.subr.bf16.mxu0 0
        %655 = vmatpush1.bf16.msra.mxu0 0
        %656 = vmatprep.subr.bf16.mxu0 0
        %657 = vmatpush1.bf16.msra.mxu0 0
        %658 = vmatprep.subr.bf16.mxu0 0
        %659 = vmatpush1.bf16.msra.mxu0 0
        %660 = vmatprep.subr.bf16.mxu0 0
        %661 = vmatpush1.bf16.msra.mxu0 0
        %662 = vmatprep.subr.bf16.mxu0 0
        %663 = vmatpush1.bf16.msra.mxu0 0
        %664 = vmatprep.subr.bf16.mxu0 0
        %665 = vmatpush1.bf16.msra.mxu0 0
        %666 = vmatprep.subr.bf16.mxu0 0
        %667 = vmatpush1.bf16.msra.mxu0 0
        %668 = vmatprep.subr.bf16.mxu0 0
        %669 = vmatpush1.bf16.msra.mxu0 0
        %670 = vmatprep.mubr.bf16.mxu0 0
        %671 = vmatmul.mubr.bf16.gmra.mrb[0].mxu0 %v632
        %v672 = vpop.f32.mrb[0].mxu0
        %v673 = vadd.f32 0.0, %v672
        %v674 = vpop.f32.mrb[0].mxu0
        %v675 = vpop.f32.mrb[0].mxu0
        %v676 = vpop.f32.mrb[0].mxu0
        %677 = vdwg.mxu0
        %678 = vrot.lane.b32.xlu0 %v562, 112
        %v679 = vpop.permute.xlu0 %678
        %680 = vrot.lane.b32.xlu0 %v562, 80
        %v681 = vpop.permute.xlu0 %680
        %v683 = vsel %vm566, %v679, 0
        %v686 = vsel %vm566, %v681, 0
        %688 = vmatprep.subr.bf16.mxu0 0
        %689 = vmatpush1.bf16.xpose.msra.mxu0 %v686
        %690 = vmatprep.subr.bf16.mxu0 0
        %691 = vmatpush1.bf16.xpose.msra.mxu0 0
        %692 = vmatprep.subr.bf16.mxu0 0
        %693 = vmatpush1.bf16.xpose.msra.mxu0 0
        %694 = vmatprep.subr.bf16.mxu0 0
        %695 = vmatpush1.bf16.xpose.msra.mxu0 0
        %696 = vmatprep.subr.bf16.mxu0 0
        %697 = vmatpush1.bf16.xpose.msra.mxu0 0
        %698 = vmatprep.subr.bf16.mxu0 0
        %699 = vmatpush1.bf16.xpose.msra.mxu0 0
        %700 = vmatprep.subr.bf16.mxu0 0
        %701 = vmatpush1.bf16.xpose.msra.mxu0 0
        %702 = vmatprep.subr.bf16.mxu0 0
        %703 = vmatpush1.bf16.xpose.msra.mxu0 0
        %704 = vmatprep.subr.bf16.mxu0 0
        %705 = vmatpush1.bf16.xpose.msra.mxu0 0
        %706 = vmatprep.subr.bf16.mxu0 0
        %707 = vmatpush1.bf16.xpose.msra.mxu0 0
        %708 = vmatprep.subr.bf16.mxu0 0
        %709 = vmatpush1.bf16.xpose.msra.mxu0 0
        %710 = vmatprep.subr.bf16.mxu0 0
        %711 = vmatpush1.bf16.xpose.msra.mxu0 0
        %712 = vmatprep.subr.bf16.mxu0 0
        %713 = vmatpush1.bf16.xpose.msra.mxu0 0
        %714 = vmatprep.subr.bf16.mxu0 0
        %715 = vmatpush1.bf16.xpose.msra.mxu0 0
        %716 = vmatprep.subr.bf16.mxu0 0
        %717 = vmatpush1.bf16.xpose.msra.mxu0 0
        %718 = vmatprep.subr.bf16.mxu0 0
        %719 = vmatpush1.bf16.xpose.msra.mxu0 0
        %720 = vmatprep.mubr.bf16.mxu0 0
        %721 = vmatmul.mubr.bf16.gmra.mrb[0].mxu0 %v683
        %v722 = vpop.f32.mrb[0].mxu0
        %v723 = vadd.f32 0.0, %v722
        %v724 = vpop.f32.mrb[0].mxu0
        %v725 = vpop.f32.mrb[0].mxu0
        %v726 = vpop.f32.mrb[0].mxu0
        %727 = vdwg.mxu0
        %v728 = vmul.f32 %v723, 0.25
        %v729 = vadd.f32 %v728, %v487
        %v730 = vsel %vm615, %v729, -inf
        %731 = vmax.xlane.f32.xlu0 %v730
        %v732 = vpop.xlane.xlu0 %731
        %v733 = vsub.f32 %v729, %v732
        %v734 = vmul.f32 %v733, 1.442695
        %v735 = vpow.pop %v734
        %v736 = vsel %vm615, %v735, 0.0
        %737 = vadd.xlane.f32.xlu0 %v736
        %v738 = vpop.xlane.xlu0 %737
        %v739 = vrcp.pop %v738
        %v740 = vmul.f32 %v735, %v739
        %s741 = scalar_lea.vmem %s476, 8 [#allocation6]
        %742 = vst.msk [vmem:[%s741] sm:$0xff] %vm615, %v740
        %v743 = vpack.c.bf16 %v740, %v740
        %744 = vrot.lane.b32.xlu0 %v562, 48
        %v745 = vpop.permute.xlu0 %744
        %v747 = vsel %vm615, %v743, 0
        %v750 = vsel %vm634, %v745, 0
        %752 = vmatprep.subr.bf16.mxu0 0
        %753 = vmatpush1.bf16.msra.mxu0 %v750
        %754 = vmatprep.subr.bf16.mxu0 0
        %755 = vmatpush1.bf16.msra.mxu0 0
        %756 = vmatprep.subr.bf16.mxu0 0
        %757 = vmatpush1.bf16.msra.mxu0 0
        %758 = vmatprep.subr.bf16.mxu0 0
        %759 = vmatpush1.bf16.msra.mxu0 0
        %760 = vmatprep.subr.bf16.mxu0 0
        %761 = vmatpush1.bf16.msra.mxu0 0
        %762 = vmatprep.subr.bf16.mxu0 0
        %763 = vmatpush1.bf16.msra.mxu0 0
        %764 = vmatprep.subr.bf16.mxu0 0
        %765 = vmatpush1.bf16.msra.mxu0 0
        %766 = vmatprep.subr.bf16.mxu0 0
        %767 = vmatpush1.bf16.msra.mxu0 0
        %768 = vmatprep.subr.bf16.mxu0 0
        %769 = vmatpush1.bf16.msra.mxu0 0
        %770 = vmatprep.subr.bf16.mxu0 0
        %771 = vmatpush1.bf16.msra.mxu0 0
        %772 = vmatprep.subr.bf16.mxu0 0
        %773 = vmatpush1.bf16.msra.mxu0 0
        %774 = vmatprep.subr.bf16.mxu0 0
        %775 = vmatpush1.bf16.msra.mxu0 0
        %776 = vmatprep.subr.bf16.mxu0 0
        %777 = vmatpush1.bf16.msra.mxu0 0
        %778 = vmatprep.subr.bf16.mxu0 0
        %779 = vmatpush1.bf16.msra.mxu0 0
        %780 = vmatprep.subr.bf16.mxu0 0
        %781 = vmatpush1.bf16.msra.mxu0 0
        %782 = vmatprep.subr.bf16.mxu0 0
        %783 = vmatpush1.bf16.msra.mxu0 0
        %784 = vmatprep.mubr.bf16.mxu0 0
        %785 = vmatmul.mubr.bf16.gmra.mrb[0].mxu0 %v747
        %v786 = vpop.f32.mrb[0].mxu0
        %v787 = vadd.f32 0.0, %v786
        %v788 = vpop.f32.mrb[0].mxu0
        %v789 = vpop.f32.mrb[0].mxu0
        %v790 = vpop.f32.mrb[0].mxu0
        %791 = vdwg.mxu0
        %793 = vrot.lane.b32.xlu0 %v787, 16
        %v794 = vpop.permute.xlu0 %793
        %v796 = vsel %vm566, %v673, %v794
        %v797 = vpack.c.bf16 %v796, %v796
        %v798 = vld [vmem:[%s4] sm:$0xf]
        %v799 = vld [vmem:[%s4 + $0x4] sm:$0xf]
        %v800 = vld [vmem:[%s4 + $0x8] sm:$0xf]
        %v801 = vld [vmem:[%s4 + $0xc] sm:$0xf]
        %v802 = vld [vmem:[%s5] sm:$0x1]
        %v804 = vlaneseq
        %v805 = vshrl.u32 %v804, 7
        %v806 = vsub.s32 0, %v805
        %v807 = vrot.slane %v802, %v806
        %v813 = vunpack.c.l.b16 %v798
        %v814 = vunpack.c.l.b16 %v799
        %v815 = vunpack.c.l.b16 %v800
        %v816 = vunpack.c.l.b16 %v801
        %v817 = vpack.c.b16 %v814, %v813
        %v818 = vpack.c.b16 %v816, %v815
        %v822 = vsel %vm518, %v797, 0
        %824 = vmatprep.subr.bf16.mxu0 0
        %825 = vmatpush1.bf16.msra.mxu0 %v817
        %826 = vmatprep.subr.bf16.mxu0 0
        %827 = vmatpush1.bf16.msra.mxu0 %v818
        %828 = vmatprep.subr.bf16.mxu0 0
        %829 = vmatpush1.bf16.msra.mxu0 0
        %830 = vmatprep.subr.bf16.mxu0 0
        %831 = vmatpush1.bf16.msra.mxu0 0
        %832 = vmatprep.subr.bf16.mxu0 0
        %833 = vmatpush1.bf16.msra.mxu0 0
        %834 = vmatprep.subr.bf16.mxu0 0
        %835 = vmatpush1.bf16.msra.mxu0 0
        %836 = vmatprep.subr.bf16.mxu0 0
        %837 = vmatpush1.bf16.msra.mxu0 0
        %838 = vmatprep.subr.bf16.mxu0 0
        %839 = vmatpush1.bf16.msra.mxu0 0
        %840 = vmatprep.subr.bf16.mxu0 0
        %841 = vmatpush1.bf16.msra.mxu0 0
        %842 = vmatprep.subr.bf16.mxu0 0
        %843 = vmatpush1.bf16.msra.mxu0 0
        %844 = vmatprep.subr.bf16.mxu0 0
        %845 = vmatpush1.bf16.msra.mxu0 0
        %846 = vmatprep.subr.bf16.mxu0 0
        %847 = vmatpush1.bf16.msra.mxu0 0
        %848 = vmatprep.subr.bf16.mxu0 0
        %849 = vmatpush1.bf16.msra.mxu0 0
        %850 = vmatprep.subr.bf16.mxu0 0
        %851 = vmatpush1.bf16.msra.mxu0 0
        %852 = vmatprep.subr.bf16.mxu0 0
        %853 = vmatpush1.bf16.msra.mxu0 0
        %854 = vmatprep.subr.bf16.mxu0 0
        %855 = vmatpush1.bf16.msra.mxu0 0
        %856 = vmatprep.mubr.bf16.mxu0 0
        %857 = vmatmul.mubr.bf16.gmra.mrb[0].mxu0 %v822
        %v858 = vpop.f32.mrb[0].mxu0
        %v859 = vadd.f32 %v807, %v858
        %v860 = vpop.f32.mrb[0].mxu0
        %v861 = vpop.f32.mrb[0].mxu0
        %v862 = vpop.f32.mrb[0].mxu0
        %863 = vdwg.mxu0
        %v864 = vadd.f32 %v859, %v493
        %v865 = vld [vmem:[%s6] sm:$0x1]
        %v866 = vld [vmem:[%s7] sm:$0x1]
        %v867 = vsel %vm518, %v864, 0.0
        %868 = vadd.xlane.f32.xlu0 %v867
        %v869 = vpop.xlane.xlu0 %868
        %v870 = vrcp.pop 32.0
        %v871 = vmul.f32 %v869, %v870
        %v872 = vsub.f32 %v864, %v871
        %v873 = vmul.f32 %v872, %v872
        %v874 = vsel %vm518, %v873, 0.0
        %875 = vadd.xlane.f32.xlu0 %v874
        %v876 = vpop.xlane.xlu0 %875
        %v877 = vmul.f32 %v876, %v870
        %v878 = vadd.f32 %v877, 1e-05
        %v879 = vrsqrt.pop %v878
        %v880 = vmul.f32 %v872, %v879
        %v882 = vlaneseq
        %v883 = vshrl.u32 %v882, 7
        %v884 = vsub.s32 0, %v883
        %v885 = vrot.slane %v865, %v884
        %v887 = vmul.f32 %v880, %v885
        %v889 = vlaneseq
        %v890 = vshrl.u32 %v889, 7
        %v891 = vsub.s32 0, %v890
        %v892 = vrot.slane %v866, %v891
        %v894 = vadd.f32 %v887, %v892
        %v895 = vmul.f32 %v894, %v492
        %v896 = vrot.slane %v895, 4
        %v897 = vadd.s32 %v489, 4294967292
        %vm898 = vcmp.ge.s32.totalorder %v897, 0
        %vm899 = vcmp.lt.s32.totalorder %v897, 8
        %vm900 = vmand %vm898, %vm899
        %v901 = vsel %vm900, 1, 0
        %v902 = vcvt.s32.f32 %v901
        %v903 = vmul.f32 %v896, %v902
        %v904 = vrot.slane %v895, 5
        %v905 = vadd.s32 %v489, 4294967293
        %vm906 = vcmp.ge.s32.totalorder %v905, 0
        %vm907 = vcmp.lt.s32.totalorder %v905, 8
        %vm908 = vmand %vm906, %vm907
        %v909 = vsel %vm908, 1, 0
        %v910 = vcvt.s32.f32 %v909
        %v911 = vmul.f32 %v904, %v910
        %v912 = vrot.slane %v895, 6
        %v913 = vadd.s32 %v489, 4294967294
        %vm914 = vcmp.ge.s32.totalorder %v913, 0
        %vm915 = vcmp.lt.s32.totalorder %v913, 8
        %vm916 = vmand %vm914, %vm915
        %v917 = vsel %vm916, 1, 0
        %v918 = vcvt.s32.f32 %v917
        %v919 = vmul.f32 %v912, %v918
        %v920 = vrot.slane %v895, 7
        %v921 = vadd.s32 %v489, 4294967295
        %vm922 = vcmp.ge.s32.totalorder %v921, 0
        %vm923 = vcmp.lt.s32.totalorder %v921, 8
        %vm924 = vmand %vm922, %vm923
        %v925 = vsel %vm924, 1, 0
        %v926 = vcvt.s32.f32 %v925
        %v927 = vmul.f32 %v920, %v926
        %v928 = vrot.slane %v895, 1
        %v929 = vadd.s32 %v489, 1
        %vm930 = vcmp.ge.s32.totalorder %v929, 0
        %vm931 = vcmp.lt.s32.totalorder %v929, 8
        %vm932 = vmand %vm930, %vm931
        %v933 = vsel %vm932, 1, 0
        %v934 = vcvt.s32.f32 %v933
        %v935 = vmul.f32 %v928, %v934
        %v936 = vrot.slane %v895, 2
        %v937 = vadd.s32 %v489, 2
        %vm938 = vcmp.ge.s32.totalorder %v937, 0
        %vm939 = vcmp.lt.s32.totalorder %v937, 8
        %vm940 = vmand %vm938, %vm939
        %v941 = vsel %vm940, 1, 0
        %v942 = vcvt.s32.f32 %v941
        %v943 = vmul.f32 %v936, %v942
        %v944 = vrot.slane %v895, 3
        %v945 = vadd.s32 %v489, 3
        %vm946 = vcmp.ge.s32.totalorder %v945, 0
        %vm947 = vcmp.lt.s32.totalorder %v945, 8
        %vm948 = vmand %vm946, %vm947
        %v949 = vsel %vm948, 1, 0
        %v950 = vcvt.s32.f32 %v949
        %v951 = vmul.f32 %v944, %v950
        %v952 = vadd.s32 %v489, 4
        %vm953 = vcmp.ge.s32.totalorder %v952, 0
        %vm954 = vcmp.lt.s32.totalorder %v952, 8
        %vm955 = vmand %vm953, %vm954
        %v956 = vsel %vm955, 1, 0
        %v957 = vcvt.s32.f32 %v956
        %v958 = vmul.f32 %v896, %v957
        %960 = vrot.lane.b32.xlu0 %v911, 32
        %v961 = vpop.permute.xlu0 %960
        %964 = vrot.lane.b32.xlu0 %v919, 64
        %v965 = vpop.permute.xlu0 %964
        %968 = vrot.lane.b32.xlu0 %v927, 96
        %v969 = vpop.permute.xlu0 %968
        %972 = vrot.lane.b32.xlu0 %v935, 32
        %v973 = vpop.permute.xlu0 %972
        %976 = vrot.lane.b32.xlu0 %v943, 64
        %v977 = vpop.permute.xlu0 %976
        %980 = vrot.lane.b32.xlu0 %v951, 96
        %v981 = vpop.permute.xlu0 %980
        %v983 = vsel %vm518, %v903, %v961
        %vm984 = vcmask 523264
        %v985 = vsel %vm984, %v983, %v965
        %vm986 = vcmask 785408
        %v987 = vsel %vm986, %v985, %v969
        %v988 = vsel %vm518, %v895, %v973
        %v989 = vsel %vm984, %v988, %v977
        %v990 = vsel %vm986, %v989, %v981
        %v991 = vpack.c.bf16 %v987, %v987
        %v992 = vpack.c.bf16 %v990, %v990
        %v993 = vpack.c.bf16 %v958, %v958
        %v994 = vld [vmem:[%s8] sm:$0xf]
        %v995 = vld [vmem:[%s8 + $0x4] sm:$0xf]
        %v996 = vld [vmem:[%s8 + $0x8] sm:$0xf]
        %v997 = vld [vmem:[%s8 + $0xc] sm:$0xf]
        %v998 = vld [vmem:[%s8 + $0x10] sm:$0xf]
        %v999 = vld [vmem:[%s8 + $0x14] sm:$0xf]
        %v1000 = vld [vmem:[%s8 + $0x18] sm:$0xf]
        %v1001 = vld [vmem:[%s8 + $0x1c] sm:$0xf]
        %v1002 = vld [vmem:[%s8 + $0x20] sm:$0xf]
        %v1003 = vld [vmem:[%s8 + $0x24] sm:$0xf]
        %v1004 = vld [vmem:[%s8 + $0x28] sm:$0xf]
        %v1005 = vld [vmem:[%s8 + $0x2c] sm:$0xf]
        %v1006 = vld [vmem:[%s8 + $0x30] sm:$0xf]
        %v1007 = vld [vmem:[%s8 + $0x34] sm:$0xf]
        %v1008 = vld [vmem:[%s8 + $0x38] sm:$0xf]
        %v1009 = vld [vmem:[%s8 + $0x3c] sm:$0xf]
        %v1010 = vld [vmem:[%s8 + $0x40] sm:$0xf]
        %v1011 = vld [vmem:[%s8 + $0x44] sm:$0xf]
        %v1012 = vld [vmem:[%s8 + $0x48] sm:$0xf]
        %v1013 = vld [vmem:[%s8 + $0x4c] sm:$0xf]
        %v1014 = vld [vmem:[%s8 + $0x50] sm:$0xf]
        %v1015 = vld [vmem:[%s8 + $0x54] sm:$0xf]
        %v1016 = vld [vmem:[%s8 + $0x58] sm:$0xf]
        %v1017 = vld [vmem:[%s8 + $0x5c] sm:$0xf]
        %v1018 = vld [vmem:[%s8 + $0x60] sm:$0xf]
        %v1019 = vld [vmem:[%s8 + $0x64] sm:$0xf]
        %v1020 = vld [vmem:[%s8 + $0x68] sm:$0xf]
        %v1021 = vld [vmem:[%s8 + $0x6c] sm:$0xf]
        %v1022 = vld [vmem:[%s8 + $0x70] sm:$0xf]
        %v1023 = vld [vmem:[%s8 + $0x74] sm:$0xf]
        %v1024 = vld [vmem:[%s8 + $0x78] sm:$0xf]
        %v1025 = vld [vmem:[%s8 + $0x7c] sm:$0xf]
        %v1026 = vld [vmem:[%s8 + $0x80] sm:$0xf]
        %v1027 = vld [vmem:[%s8 + $0x84] sm:$0xf]
        %v1028 = vld [vmem:[%s8 + $0x88] sm:$0xf]
        %v1029 = vld [vmem:[%s8 + $0x8c] sm:$0xf]
        %v1030 = vld [vmem:[%s9] sm:$0x1]
        %v1032 = vlaneseq
        %v1033 = vshrl.u32 %v1032, 7
        %v1034 = vsub.s32 0, %v1033
        %v1035 = vrot.slane %v1030, %v1034
        %v1073 = vunpack.c.l.b16 %v994
        %v1074 = vunpack.c.l.b16 %v995
        %v1075 = vunpack.c.l.b16 %v996
        %v1076 = vunpack.c.l.b16 %v997
        %v1077 = vunpack.c.l.b16 %v998
        %v1078 = vunpack.c.l.b16 %v999
        %v1079 = vunpack.c.l.b16 %v1000
        %v1080 = vunpack.c.l.b16 %v1001
        %v1081 = vunpack.c.l.b16 %v1002
        %v1082 = vunpack.c.l.b16 %v1003
        %v1083 = vunpack.c.l.b16 %v1004
        %v1084 = vunpack.c.l.b16 %v1005
        %v1085 = vunpack.c.l.b16 %v1006
        %v1086 = vunpack.c.l.b16 %v1007
        %v1087 = vunpack.c.l.b16 %v1008
        %v1088 = vunpack.c.l.b16 %v1009
        %v1089 = vunpack.c.l.b16 %v1010
        %v1090 = vunpack.c.l.b16 %v1011
        %v1091 = vunpack.c.l.b16 %v1012
        %v1092 = vunpack.c.l.b16 %v1013
        %v1093 = vunpack.c.l.b16 %v1014
        %v1094 = vunpack.c.l.b16 %v1015
        %v1095 = vunpack.c.l.b16 %v1016
        %v1096 = vunpack.c.l.b16 %v1017
        %v1097 = vunpack.c.l.b16 %v1018
        %v1098 = vunpack.c.l.b16 %v1019
        %v1099 = vunpack.c.l.b16 %v1020
        %v1100 = vunpack.c.l.b16 %v1021
        %v1101 = vunpack.c.l.b16 %v1022
        %v1102 = vunpack.c.l.b16 %v1023
        %v1103 = vunpack.c.l.b16 %v1024
        %v1104 = vunpack.c.l.b16 %v1025
        %v1105 = vunpack.c.l.b16 %v1026
        %v1106 = vunpack.c.l.b16 %v1027
        %v1107 = vunpack.c.l.b16 %v1028
        %v1108 = vunpack.c.l.b16 %v1029
        %v1109 = vpack.c.b16 %v1074, %v1073
        %v1110 = vpack.c.b16 %v1076, %v1075
        %v1111 = vpack.c.b16 %v1078, %v1077
        %v1112 = vpack.c.b16 %v1080, %v1079
        %v1113 = vpack.c.b16 %v1082, %v1081
        %v1114 = vpack.c.b16 %v1084, %v1083
        %v1115 = vpack.c.b16 %v1086, %v1085
        %v1116 = vpack.c.b16 %v1088, %v1087
        %v1117 = vpack.c.b16 %v1090, %v1089
        %v1118 = vpack.c.b16 %v1092, %v1091
        %v1119 = vpack.c.b16 %v1094, %v1093
        %v1120 = vpack.c.b16 %v1096, %v1095
        %v1121 = vpack.c.b16 %v1098, %v1097
        %v1122 = vpack.c.b16 %v1100, %v1099
        %v1123 = vpack.c.b16 %v1102, %v1101
        %v1124 = vpack.c.b16 %v1104, %v1103
        %v1125 = vpack.c.b16 %v1106, %v1105
        %v1126 = vpack.c.b16 %v1108, %v1107
        %v1146 = vsel %vm518, %v993, 0
        %1148 = vmatprep.subr.bf16.mxu0 0
        %1149 = vmatpush1.bf16.msra.mxu0 %v1109
        %1150 = vmatprep.subr.bf16.mxu0 0
        %1151 = vmatpush1.bf16.msra.mxu0 %v1110
        %1152 = vmatprep.subr.bf16.mxu0 0
        %1153 = vmatpush1.bf16.msra.mxu0 %v1111
        %1154 = vmatprep.subr.bf16.mxu0 0
        %1155 = vmatpush1.bf16.msra.mxu0 %v1112
        %1156 = vmatprep.subr.bf16.mxu0 0
        %1157 = vmatpush1.bf16.msra.mxu0 %v1113
        %1158 = vmatprep.subr.bf16.mxu0 0
        %1159 = vmatpush1.bf16.msra.mxu0 %v1114
        %1160 = vmatprep.subr.bf16.mxu0 0
        %1161 = vmatpush1.bf16.msra.mxu0 %v1115
        %1162 = vmatprep.subr.bf16.mxu0 0
        %1163 = vmatpush1.bf16.msra.mxu0 %v1116
        %1164 = vmatprep.subr.bf16.mxu0 0
        %1165 = vmatpush1.bf16.msra.mxu0 %v1117
        %1166 = vmatprep.subr.bf16.mxu0 0
        %1167 = vmatpush1.bf16.msra.mxu0 %v1118
        %1168 = vmatprep.subr.bf16.mxu0 0
        %1169 = vmatpush1.bf16.msra.mxu0 %v1119
        %1170 = vmatprep.subr.bf16.mxu0 0
        %1171 = vmatpush1.bf16.msra.mxu0 %v1120
        %1172 = vmatprep.subr.bf16.mxu0 0
        %1173 = vmatpush1.bf16.msra.mxu0 %v1121
        %1174 = vmatprep.subr.bf16.mxu0 0
        %1175 = vmatpush1.bf16.msra.mxu0 %v1122
        %1176 = vmatprep.subr.bf16.mxu0 0
        %1177 = vmatpush1.bf16.msra.mxu0 %v1123
        %1178 = vmatprep.subr.bf16.mxu0 0
        %1179 = vmatpush1.bf16.msra.mxu0 %v1124
        %1180 = vmatprep.mubr.bf16.mxu0 %v992
        %1181 = vmatmul.mubr.bf16.gmra.mrb[0].mxu0 %v991
        %v1182 = vpop.f32.mrb[0].mxu0
        %v1183 = vadd.f32 %v1035, %v1182
        %v1184 = vpop.f32.mrb[0].mxu0
        %v1185 = vpop.f32.mrb[0].mxu0
        %v1186 = vpop.f32.mrb[0].mxu0
        %1187 = vdwg.mxu0
        %1188 = vmatprep.subr.bf16.mxu0 0
        %1189 = vmatpush1.bf16.msra.mxu0 %v1125
        %1190 = vmatprep.subr.bf16.mxu0 0
        %1191 = vmatpush1.bf16.msra.mxu0 %v1126
        %1192 = vmatprep.subr.bf16.mxu0 0
        %1193 = vmatpush1.bf16.msra.mxu0 0
        %1194 = vmatprep.subr.bf16.mxu0 0
        %1195 = vmatpush1.bf16.msra.mxu0 0
        %1196 = vmatprep.subr.bf16.mxu0 0
        %1197 = vmatpush1.bf16.msra.mxu0 0
        %1198 = vmatprep.subr.bf16.mxu0 0
        %1199 = vmatpush1.bf16.msra.mxu0 0
        %1200 = vmatprep.subr.bf16.mxu0 0
        %1201 = vmatpush1.bf16.msra.mxu0 0
        %1202 = vmatprep.subr.bf16.mxu0 0
        %1203 = vmatpush1.bf16.msra.mxu0 0
        %1204 = vmatprep.subr.bf16.mxu0 0
        %1205 = vmatpush1.bf16.msra.mxu0 0
        %1206 = vmatprep.subr.bf16.mxu0 0
        %1207 = vmatpush1.bf16.msra.mxu0 0
        %1208 = vmatprep.subr.bf16.mxu0 0
        %1209 = vmatpush1.bf16.msra.mxu0 0
        %1210 = vmatprep.subr.bf16.mxu0 0
        %1211 = vmatpush1.bf16.msra.mxu0 0
        %1212 = vmatprep.subr.bf16.mxu0 0
        %1213 = vmatpush1.bf16.msra.mxu0 0
        %1214 = vmatprep.subr.bf16.mxu0 0
        %1215 = vmatpush1.bf16.msra.mxu0 0
        %1216 = vmatprep.subr.bf16.mxu0 0
        %1217 = vmatpush1.bf16.msra.mxu0 0
        %1218 = vmatprep.subr.bf16.mxu0 0
        %1219 = vmatpush1.bf16.msra.mxu0 0
        %1220 = vmatprep.mubr.bf16.mxu0 0
        %1221 = vmatmul.mubr.bf16.gmra.mrb[0].mxu0 %v1146
        %v1222 = vpop.f32.mrb[0].mxu0
        %v1223 = vadd.f32 %v1183, %v1222
        %v1224 = vpop.f32.mrb[0].mxu0
        %v1225 = vpop.f32.mrb[0].mxu0
        %v1226 = vpop.f32.mrb[0].mxu0
        %1227 = vdwg.mxu0
        %v1228 = vmax.f32 %v1223, 0.0
        %v1229 = vpack.c.bf16 %v1228, %v1228
        %v1230 = vld [vmem:[%s10] sm:$0xf]
        %v1231 = vld [vmem:[%s10 + $0x4] sm:$0xf]
        %v1232 = vld [vmem:[%s10 + $0x8] sm:$0xf]
        %v1233 = vld [vmem:[%s10 + $0xc] sm:$0xf]
        %v1234 = vld [vmem:[%s10 + $0x10] sm:$0xf]
        %v1235 = vld [vmem:[%s10 + $0x14] sm:$0xf]
        %v1236 = vld [vmem:[%s10 + $0x18] sm:$0xf]
        %v1237 = vld [vmem:[%s10 + $0x1c] sm:$0xf]
        %v1238 = vld [vmem:[%s11] sm:$0x1]
        %v1240 = vlaneseq
        %v1241 = vshrl.u32 %v1240, 7
        %v1242 = vsub.s32 0, %v1241
        %v1243 = vrot.slane %v1238, %v1242
        %v1253 = vunpack.c.l.b16 %v1230
        %v1254 = vunpack.c.l.b16 %v1231
        %v1255 = vunpack.c.l.b16 %v1232
        %v1256 = vunpack.c.l.b16 %v1233
        %v1257 = vunpack.c.l.b16 %v1234
        %v1258 = vunpack.c.l.b16 %v1235
        %v1259 = vunpack.c.l.b16 %v1236
        %v1260 = vunpack.c.l.b16 %v1237
        %v1261 = vpack.c.b16 %v1254, %v1253
        %v1262 = vpack.c.b16 %v1256, %v1255
        %v1263 = vpack.c.b16 %v1258, %v1257
        %v1264 = vpack.c.b16 %v1260, %v1259
        %v1270 = vsel %vm984, %v1229, 0
        %1272 = vmatprep.subr.bf16.mxu0 0
        %1273 = vmatpush1.bf16.msra.mxu0 %v1261
        %1274 = vmatprep.subr.bf16.mxu0 0
        %1275 = vmatpush1.bf16.msra.mxu0 %v1262
        %1276 = vmatprep.subr.bf16.mxu0 0
        %1277 = vmatpush1.bf16.msra.mxu0 %v1263
        %1278 = vmatprep.subr.bf16.mxu0 0
        %1279 = vmatpush1.bf16.msra.mxu0 %v1264
        %1280 = vmatprep.subr.bf16.mxu0 0
        %1281 = vmatpush1.bf16.msra.mxu0 0
        %1282 = vmatprep.subr.bf16.mxu0 0
        %1283 = vmatpush1.bf16.msra.mxu0 0
        %1284 = vmatprep.subr.bf16.mxu0 0
        %1285 = vmatpush1.bf16.msra.mxu0 0
        %1286 = vmatprep.subr.bf16.mxu0 0
        %1287 = vmatpush1.bf16.msra.mxu0 0
        %1288 = vmatprep.subr.bf16.mxu0 0
        %1289 = vmatpush1.bf16.msra.mxu0 0
        %1290 = vmatprep.subr.bf16.mxu0 0
        %1291 = vmatpush1.bf16.msra.mxu0 0
        %1292 = vmatprep.subr.bf16.mxu0 0
        %1293 = vmatpush1.bf16.msra.mxu0 0
        %1294 = vmatprep.subr.bf16.mxu0 0
        %1295 = vmatpush1.bf16.msra.mxu0 0
        %1296 = vmatprep.subr.bf16.mxu0 0
        %1297 = vmatpush1.bf16.msra.mxu0 0
        %1298 = vmatprep.subr.bf16.mxu0 0
        %1299 = vmatpush1.bf16.msra.mxu0 0
        %1300 = vmatprep.subr.bf16.mxu0 0
        %1301 = vmatpush1.bf16.msra.mxu0 0
        %1302 = vmatprep.subr.bf16.mxu0 0
        %1303 = vmatpush1.bf16.msra.mxu0 0
        %1304 = vmatprep.mubr.bf16.mxu0 0
        %1305 = vmatmul.mubr.bf16.gmra.mrb[0].mxu0 %v1270
        %v1306 = vpop.f32.mrb[0].mxu0
        %v1307 = vadd.f32 %v1243, %v1306
        %v1308 = vpop.f32.mrb[0].mxu0
        %v1309 = vpop.f32.mrb[0].mxu0
        %v1310 = vpop.f32.mrb[0].mxu0
        %1311 = vdwg.mxu0
        %v1312 = vadd.f32 %v1307, %v895
        %v1313 = vld [vmem:[%s12] sm:$0x1]
        %v1314 = vld [vmem:[%s13] sm:$0x1]
        %v1315 = vsel %vm518, %v1312, 0.0
        %1316 = vadd.xlane.f32.xlu0 %v1315
        %v1317 = vpop.xlane.xlu0 %1316
        %v1318 = vmul.f32 %v1317, %v870
        %v1319 = vsub.f32 %v1312, %v1318
        %v1320 = vmul.f32 %v1319, %v1319
        %v1321 = vsel %vm518, %v1320, 0.0
        %1322 = vadd.xlane.f32.xlu0 %v1321
        %v1323 = vpop.xlane.xlu0 %1322
        %v1324 = vmul.f32 %v1323, %v870
        %v1325 = vadd.f32 %v1324, 1e-05
        %v1326 = vrsqrt.pop %v1325
        %v1327 = vmul.f32 %v1319, %v1326
        %v1329 = vlaneseq
        %v1330 = vshrl.u32 %v1329, 7
        %v1331 = vsub.s32 0, %v1330
        %v1332 = vrot.slane %v1313, %v1331
        %v1334 = vmul.f32 %v1327, %v1332
        %v1336 = vlaneseq
        %v1337 = vshrl.u32 %v1336, 7
        %v1338 = vsub.s32 0, %v1337
        %v1339 = vrot.slane %v1314, %v1338
        %v1341 = vadd.f32 %v1334, %v1339
        %v1342 = vmul.f32 %v1341, %v492
        %1343 = vst.msk [vmem:[%s469] sm:$0xff] %vm518, %v1342
        %s1344 = sand.u32 %s325, 1
        %s1345 = scalar_lea.sflag [#allocation5], %s1344
        %s1346 = sand.u32 %s325, 1
        %s1347 = smul.addr %s1346, 8
        %s1348 = scalar_lea.vmem [#allocation4], %s1347
        %s1349 = sand.u32 %s351, 1
        %s1350 = scalar_lea.sflag [#allocation7], %s1349
        %s1351 = sand.u32 %s351, 1
        %s1352 = smul.addr %s1351, 16
        %s1353 = scalar_lea.vmem [#allocation6], %s1352
        // Predicated region
        $region73: #{tpu_custom_call.1} parent=71 // pred_check
          %p1354 = pneg %p335
        $region74: #{tpu_custom_call.1} parent=71 // pred_check_branch
          %1356 = sbr.rel (%p1354) target = $region76
        $region75: #{tpu_custom_call.1} parent=71 // pred_region
          %s1358 = ssub.s32 128, 128
          %1359 = vsyncadd %s1345, %s1358
          %s1360 = smul.addr %s39, 128
          %s1361 = scalar_lea.hbm %s14, %s1360
          %s1363 = sshll.u32 %s1348, 4
          %s1364 = int_to_ptr.vmem [resolvable:$true] %s1363
          %1366 = dma.vmem_to_hbm [thread:$0]  %s1364, 128, %s1361, %s1345
        $region76: #{tpu_custom_call.1} parent=71 // pred_fallthru
          _
        // Predicated region
        $region77: #{tpu_custom_call.1} parent=71 // pred_check
          %p1367 = pneg %p361
        $region78: #{tpu_custom_call.1} parent=71 // pred_check_branch
          %1369 = sbr.rel (%p1367) target = $region80
        $region79: #{tpu_custom_call.1} parent=71 // pred_region
          %s1371 = ssub.s32 256, 256
          %1372 = vsyncadd %s1350, %s1371
          %s1373 = smul.addr %s39, 128
          %s1374 = scalar_lea.hbm %s15, %s1373
          %s1375 = sshll.u32 %s1353, 4
          %s1376 = int_to_ptr.vmem [resolvable:$true] %s1375
          %1381 = dma.vmem_to_hbm [thread:$0]  %s1376, 256, %s1374, %s1350, 128, 256, 8
        $region80: #{tpu_custom_call.1} parent=71 // pred_fallthru
          _
      $region72: #{tpu_custom_call.1} parent=5 // pred_fallthru
        _
      %p1382 = scmp.le.s32.totalorder 2, %s34
      // Predicated region
      $region81: #{tpu_custom_call.1} parent=5 // pred_check
        %p1383 = pneg %p1382
      $region82: #{tpu_custom_call.1} parent=5 // pred_check_branch
        %1385 = sbr.rel (%p1383) target = $region84
      $region83: #{tpu_custom_call.1} parent=5 // pred_region
        %s1386 = ssub.s32 %s34, 2
        // Predicated region
        $region85: #{tpu_custom_call.1} parent=83 // pred_check
          %p1387 = pneg %p341
        $region86: #{tpu_custom_call.1} parent=83 // pred_check_branch
          %1389 = sbr.rel (%p1387) target = $region88
        $region87: #{tpu_custom_call.1} parent=83 // pred_region
          %s1390 = sand.u32 %s326, 1
          %s1391 = scalar_lea.sflag [#allocation5], %s1390
          %s1392 = sand.u32 %s326, 1
          %s1393 = smul.addr %s1392, 8
          %s1394 = scalar_lea.vmem [#allocation4], %s1393
          %1395 = dma.done %s1391, 128
        $region88: #{tpu_custom_call.1} parent=83 // pred_fallthru
          _
        // Predicated region
        $region89: #{tpu_custom_call.1} parent=83 // pred_check
          %p1396 = pneg %p367
        $region90: #{tpu_custom_call.1} parent=83 // pred_check_branch
          %1398 = sbr.rel (%p1396) target = $region92
        $region91: #{tpu_custom_call.1} parent=83 // pred_region
          %s1399 = sand.u32 %s352, 1
          %s1400 = scalar_lea.sflag [#allocation7], %s1399
          %s1401 = sand.u32 %s352, 1
          %s1402 = smul.addr %s1401, 16
          %s1403 = scalar_lea.vmem [#allocation6], %s1402
          %1404 = dma.done %s1400, 256
        $region92: #{tpu_custom_call.1} parent=83 // pred_fallthru
          _
      $region84: #{tpu_custom_call.1} parent=5 // pred_fallthru
        _
    $region6: #{tpu_custom_call.1} parent=1 // loop_footer
      %s38 = sadd.s32 1, %s34
    $region7: #{tpu_custom_call.1} parent=1 // loop_footer_branch
      %33 = sbr.rel target = $region3
    $region8: #{tpu_custom_call.1} parent=1 // loop_exit
      _
    %1405 = vsyncpa [#allocation5], 1
    %s1406 = scalar_lea.sflag [#allocation5], 1
    %1407 = vsyncpa %s1406, 1
    %1408 = vsyncpa [#allocation7], 1
    %s1409 = scalar_lea.sflag [#allocation7], 1
    %1410 = vsyncpa %s1409, 1

</llo_original>
